<compile_context>
chip_gen: v6e
topology: v6e:2x2x1
jax: 0.10.0
libtpu: 0.0.40
codegen_flags: <defaults>
</compile_context>

<pallas_src>
import math
import numpy as np
import jax
import jax.numpy as jnp
from jax import lax
from jax.experimental import pallas as pl
from jax.experimental.pallas import tpu as pltpu

EPS = 1e-6  # naive SimpleRMSNorm eps: x * rsqrt(mean(x^2, -1) + eps)


# ----------------------------- kernel helpers --------------------------------

def _srms(x):
    ms = jnp.mean(x * x, axis=-1, keepdims=True)
    return x * lax.rsqrt(ms + EPS)


def _dot(a, b):
    return jnp.dot(a, b, preferred_element_type=jnp.float32)


def _dot_nt(a, b):
    # a @ b.T (contract last dims of both operands) — no explicit transpose.
    return lax.dot_general(a, b, (((1,), (1,)), ((), ())),
                           preferred_element_type=jnp.float32)


# ----------------------------- fused kernel ----------------------------------

def make_fused_kernel(cfg, B, N, use_lrpe_flags):
    D, H, L, V = cfg["n_embd"], cfg["n_head"], cfg["n_layer"], cfg["vocab_size"]
    BN = B * N

    def expand_rows(t):
        # (B*N, W) -> (B*H*N, W); row (b, h, m) = t[b*N + m].
        # Only aligned (N=8)-sublane block copies, no lane shuffles.
        parts = []
        for b in range(B):
            blk = t[b * N:(b + 1) * N, :]
            parts.extend([blk] * H)
        return jnp.concatenate(parts, axis=0)

    def kernel(idx_ref, wte_ref, wqkvu_ref, wout_ref, w12_ref, w3_ref,
               decay_ref, cos_ref, sin_ref, hmd_ref, hm2_ref, lmh_ref, o_ref):
        # ---- embedding lookup as a one-hot matmul (gather folded into the kernel) ----
        ids = idx_ref[...]                                               # (BN, 1) int32
        onehot = (lax.broadcasted_iota(jnp.int32, (BN, V), 1) == ids
                  ).astype(jnp.float32)                                  # (BN, V)
        x = _dot(onehot, wte_ref[...])                                   # (BN, D)

        hmd = hmd_ref[...]                                               # (B*H*N, D)
        for i in range(L):                                               # static, unrolled
            # -------- token mixer: NormLinearAttention --------
            xn = _srms(x)
            qkvu = _dot(xn, wqkvu_ref[i])                                # (BN, 4D) lane-dense
            q = jax.nn.silu(qkvu[:, 0 * D:1 * D])
            k = jax.nn.silu(qkvu[:, 1 * D:2 * D])
            v = qkvu[:, 2 * D:3 * D]
            u = qkvu[:, 3 * D:4 * D]

            if use_lrpe_flags[i]:
                cos = cos_ref[...]
                sin = sin_ref[...]
                qcat = jnp.concatenate([q * cos, q * sin], axis=-1)      # (BN, 2D)
                kcat = jnp.concatenate([k * cos, k * sin], axis=-1)      # (BN, 2D)
                scores = _dot_nt(qcat, expand_rows(kcat) * hm2_ref[...]) # (BN, B*H*N)
            else:
                scores = _dot_nt(q, expand_rows(k) * hmd)                # (BN, B*H*N)

            # decay table already contains exp(slope*attn_mask), the causal zeroing
            # and the same-batch block mask -> one dense elementwise multiply.
            e = scores * decay_ref[i]                                    # (BN, B*H*N)
            attn = _dot(e, expand_rows(v) * hmd)                         # (BN, D) == 'b n (h d)'

            y = _srms(attn) * u                                          # norm(output) * u
            x = x + _dot(y, wout_ref[i])                                 # out_proj + residual

            # -------- channel mixer: SGLU (l1 || l2 fused) --------
            xn = _srms(x)
            o12 = _dot(xn, w12_ref[i])                                   # (BN, 4D)
            x = x + _dot(o12[:, :2 * D] * o12[:, 2 * D:], w3_ref[i])

        # -------- ln_f + lm_head at the last position only (targets=None) --------
        xn = _srms(x)
        last = jnp.concatenate(
            [xn[(b + 1) * N - 1:(b + 1) * N, :] for b in range(B)], axis=0)  # (B, D)
        o_ref[...] = _dot(last, lmh_ref[...])                            # (B, Vpad) lane-dense

    return kernel


# ----------------------------- host-side constants ----------------------------

def build_slopes(n_head):
    def get_slopes(n):
        def p2(n):
            start = 2 ** (-2 ** (-(math.log2(n) - 3)))
            return [start * start ** i for i in range(n)]
        if math.log2(n).is_integer():
            return p2(n)
        cp = 2 ** math.floor(math.log2(n))
        return p2(cp) + get_slopes(2 * cp)[0::2][: n - cp]
    return np.asarray(get_slopes(n_head), dtype=np.float32)


def build_constants(cfg, theta, B, N):
    """All forward-invariant tables, computed once on host (numpy) at init."""
    D, H, L = cfg["n_embd"], cfg["n_head"], cfg["n_layer"]
    Dh = D // H
    BN, BHN = B * N, B * H * N

    # Combined per-layer mask = exp(slope*attn_mask) * causal * same-batch block,
    # packed lane-dense as (BN, B*H*N) to match the expanded-row score layout.
    slopes = build_slopes(H)
    pos = np.arange(N, dtype=np.float32)
    diff = np.maximum(pos[:, None] - pos[None, :], 0.0)                 # clamp -> no inf*0
    causal = (pos[None, :] <= pos[:, None]).astype(np.float32)
    denom = max(L - 1, 1)   # guard n_layer == 1 (reference divides by zero there)
    decay = np.zeros((L, BN, BHN), dtype=np.float32)
    for l in range(L):
        sl = slopes * (1.0 - l / denom + 1e-5)                          # per-layer slope_rate
        per_head = np.exp(-sl[:, None, None] * diff) * causal           # (H, N, N)
        for b in range(B):
            for h in range(H):
                decay[l, b * N:(b + 1) * N,
                      b * H * N + h * N: b * H * N + (h + 1) * N] = per_head[h]

    # Head masks for the expanded-row layouts.
    row_head = (np.arange(BHN) // N) % H
    lane_head = np.arange(D) // Dh
    hm_d = (row_head[:, None] == lane_head[None, :]).astype(np.float32)  # (BHN, D)
    hm_2d = np.concatenate([hm_d, hm_d], axis=1)                         # (BHN, 2D)

    # LRPE cos/sin tables in the stacked (b n, (h d)) activation layout.
    th = theta * pos.reshape(1, N, 1)                                    # (H, N, Dh)
    th = np.transpose(th, (1, 0, 2)).reshape(N, D)
    cos = np.tile(np.cos(th), (B, 1)).astype(np.float32)                 # (BN, D)
    sin = np.tile(np.sin(th), (B, 1)).astype(np.float32)

    return dict(decay=jnp.asarray(decay), hm_d=jnp.asarray(hm_d),
                hm_2d=jnp.asarray(hm_2d), cos=jnp.asarray(cos), sin=jnp.asarray(sin))


# ----------------------------- params ------------------------------------------

def init_params(key, cfg):
    D, H, V, L = cfg["n_embd"], cfg["n_head"], cfg["vocab_size"], cfg["n_layer"]
    Dh = D // H
    std = 0.02
    Vpad = max(128, ((V + 127) // 128) * 128)
    keys = jax.random.split(key, 1 + 5 * L)
    wte = jax.random.normal(keys[0], (V, D), jnp.float32) * std          # tied with lm_head

    def stack(shape, k0):
        return jnp.stack([jax.random.normal(keys[k0 + 5 * i], shape, jnp.float32) * std
                          for i in range(L)])

    w1 = stack((D, 2 * D), 3)
    w2 = stack((D, 2 * D), 4)

    # Lrpe theta: 10000 ** (-2/d * arange(d)), d = n_head * head_dim = n_embd
    theta = (10000.0 ** (-2.0 / D * np.arange(D, dtype=np.float64))
             ).astype(np.float32).reshape(H, 1, Dh)

    # lm_head = wte^T (weight tying), pre-transposed once and lane-padded to 128.
    lm_head_pad = jnp.zeros((D, Vpad), jnp.float32).at[:, :V].set(wte.T)

    return {
        "wte": wte,
        "w_qkvu": stack((D, 4 * D), 1),
        "w_out":  stack((D, D),     2),
        "w12":    jnp.concatenate([w1, w2], axis=-1),   # fused SGLU l1 || l2 -> (L, D, 4D)
        "w3":     stack((2 * D, D), 5),
        "theta":  theta,                                # numpy; used by use_lrpe layers (idx > 0)
        "lm_head_pad": lm_head_pad,
    }


# ----------------------------- forward wrapper ----------------------------------

def transnormer_forward(params, consts, idx, cfg):
    D, L, V = cfg["n_embd"], cfg["n_layer"], cfg["vocab_size"]
    B, N = idx.shape
    BN = B * N
    Vpad = params["lm_head_pad"].shape[1]

    use_lrpe_flags = tuple(i > 0 for i in range(L))     # Block(config, use_lrpe=_ > 0)
    kernel = make_fused_kernel(cfg, B, N, use_lrpe_flags)

    vmem = pl.BlockSpec(memory_space=pltpu.MemorySpace.VMEM)

    logits_pad = pl.pallas_call(
        kernel,
        out_shape=jax.ShapeDtypeStruct((B, Vpad), jnp.float32),
        in_specs=[vmem] * 12,
        out_specs=vmem,
    )(idx.reshape(BN, 1).astype(jnp.int32),
      params["wte"], params["w_qkvu"], params["w_out"], params["w12"], params["w3"],
      consts["decay"], consts["cos"], consts["sin"], consts["hm_d"], consts["hm_2d"],
      params["lm_head_pad"])

    return logits_pad[:, :V].reshape(B, 1, V)


# ----------------------------- main --------------------------------------------

if __name__ == "__main__":
    cfg = dict(vocab_size=64, block_size=16, n_layer=2, n_head=4, n_embd=32)
    B, N = 2, 8

    key = jax.random.PRNGKey(0)
    pkey, ikey = jax.random.split(key)
    params = init_params(pkey, cfg)
    consts = build_constants(cfg, params["theta"], B, N)   # host-precomputed, hoisted out of fwd
    idx = jax.random.randint(ikey, (B, N), 0, cfg["vocab_size"])

    logits = transnormer_forward(params, consts, idx, cfg)
    jax.block_until_ready(logits)
    assert logits.shape == (B, 1, cfg["vocab_size"])
    print("KERNEL_OK")
</pallas_src>

<mosaic_0001>
module attributes {stable_mosaic.version = 11 : i64} {
  func.func @kernel(%arg0: memref<16x1xi32, #tpu.memory_space<vmem>>, %arg1: memref<64x32xf32, #tpu.memory_space<vmem>>, %arg2: memref<2x32x128xf32, #tpu.memory_space<vmem>>, %arg3: memref<2x32x32xf32, #tpu.memory_space<vmem>>, %arg4: memref<2x32x128xf32, #tpu.memory_space<vmem>>, %arg5: memref<2x64x32xf32, #tpu.memory_space<vmem>>, %arg6: memref<2x16x64xf32, #tpu.memory_space<vmem>>, %arg7: memref<16x32xf32, #tpu.memory_space<vmem>>, %arg8: memref<16x32xf32, #tpu.memory_space<vmem>>, %arg9: memref<64x32xf32, #tpu.memory_space<vmem>>, %arg10: memref<64x64xf32, #tpu.memory_space<vmem>>, %arg11: memref<32x128xf32, #tpu.memory_space<vmem>>, %arg12: memref<2x128xf32, #tpu.memory_space<vmem>>) attributes {dimension_semantics = [], scalar_prefetch = 0 : i64, scratch_operands = 0 : i64, tpu.core_type = #tpu.core_type<tc>} {
    %c0 = arith.constant 0 : index
    %c0_0 = arith.constant 0 : index
    %0 = vector.load %arg0[%c0, %c0_0] : memref<16x1xi32, #tpu.memory_space<vmem>>, vector<16x1xi32>
    %1 = tpu.iota {dimensions = array<i32: 1>} : vector<16x64xi32>
    %2 = vector.broadcast %0 : vector<16x1xi32> to vector<16x64xi32>
    %3 = arith.cmpi eq, %1, %2 : vector<16x64xi32>
    %4 = arith.extui %3 : vector<16x64xi1> to vector<16x64xi32>
    %5 = arith.sitofp %4 : vector<16x64xi32> to vector<16x64xf32>
    %c0_1 = arith.constant 0 : index
    %c0_2 = arith.constant 0 : index
    %6 = vector.load %arg1[%c0_1, %c0_2] : memref<64x32xf32, #tpu.memory_space<vmem>>, vector<64x32xf32>
    %cst = arith.constant dense<0.000000e+00> : vector<16x32xf32>
    %7 = tpu.matmul %5, %6, %cst {dimension_numbers = #tpu.dot_dimension_numbers<[1], [0], [0], [1], [0, 0, 1, 1], [], []>} : vector<16x64xf32>, vector<64x32xf32>, vector<16x32xf32> -> vector<16x32xf32>
    %c0_3 = arith.constant 0 : index
    %c0_4 = arith.constant 0 : index
    %8 = vector.load %arg9[%c0_3, %c0_4] : memref<64x32xf32, #tpu.memory_space<vmem>>, vector<64x32xf32>
    %9 = arith.mulf %7, %7 : vector<16x32xf32>
    %cst_5 = arith.constant dense<0.000000e+00> : vector<16xf32>
    %10 = vector.multi_reduction <add>, %9, %cst_5 [1] : vector<16x32xf32> to vector<16xf32>
    %11 = vector.shape_cast %10 : vector<16xf32> to vector<16x1xf32>
    %cst_6 = arith.constant 3.200000e+01 : f32
    %12 = vector.broadcast %cst_6 : f32 to vector<16x1xf32>
    %13 = arith.divf %11, %12 : vector<16x1xf32>
    %cst_7 = arith.constant 9.99999997E-7 : f32
    %14 = vector.broadcast %cst_7 : f32 to vector<16x1xf32>
    %15 = arith.addf %13, %14 : vector<16x1xf32>
    %16 = math.rsqrt %15 : vector<16x1xf32>
    %17 = vector.broadcast %16 : vector<16x1xf32> to vector<16x32xf32>
    %18 = arith.mulf %7, %17 : vector<16x32xf32>
    %c0_8 = arith.constant 0 : index
    %c0_9 = arith.constant 0 : index
    %c0_10 = arith.constant 0 : index
    %19 = vector.load %arg2[%c0_8, %c0_9, %c0_10] : memref<2x32x128xf32, #tpu.memory_space<vmem>>, vector<1x32x128xf32>
    %20 = vector.shape_cast %19 : vector<1x32x128xf32> to vector<32x128xf32>
    %cst_11 = arith.constant dense<0.000000e+00> : vector<16x128xf32>
    %21 = tpu.matmul %18, %20, %cst_11 {dimension_numbers = #tpu.dot_dimension_numbers<[1], [0], [0], [1], [0, 0, 1, 1], [], []>} : vector<16x32xf32>, vector<32x128xf32>, vector<16x128xf32> -> vector<16x128xf32>
    %22 = vector.extract_strided_slice %21 {offsets = [0, 0], sizes = [16, 32], strides = [1, 1]} : vector<16x128xf32> to vector<16x32xf32>
    %23 = arith.negf %22 : vector<16x32xf32>
    %24 = math.exp %23 : vector<16x32xf32>
    %cst_12 = arith.constant 1.000000e+00 : f32
    %25 = vector.broadcast %cst_12 : f32 to vector<16x32xf32>
    %26 = arith.addf %25, %24 : vector<16x32xf32>
    %27 = arith.divf %25, %26 : vector<16x32xf32>
    %28 = arith.mulf %22, %27 : vector<16x32xf32>
    %29 = vector.extract_strided_slice %21 {offsets = [0, 32], sizes = [16, 32], strides = [1, 1]} : vector<16x128xf32> to vector<16x32xf32>
    %30 = arith.negf %29 : vector<16x32xf32>
    %31 = math.exp %30 : vector<16x32xf32>
    %cst_13 = arith.constant 1.000000e+00 : f32
    %32 = vector.broadcast %cst_13 : f32 to vector<16x32xf32>
    %33 = arith.addf %32, %31 : vector<16x32xf32>
    %34 = arith.divf %32, %33 : vector<16x32xf32>
    %35 = arith.mulf %29, %34 : vector<16x32xf32>
    %36 = vector.extract_strided_slice %21 {offsets = [0, 64], sizes = [16, 32], strides = [1, 1]} : vector<16x128xf32> to vector<16x32xf32>
    %37 = vector.extract_strided_slice %21 {offsets = [0, 96], sizes = [16, 32], strides = [1, 1]} : vector<16x128xf32> to vector<16x32xf32>
    %38 = vector.extract_strided_slice %35 {offsets = [0, 0], sizes = [8, 32], strides = [1, 1]} : vector<16x32xf32> to vector<8x32xf32>
    %39 = vector.extract_strided_slice %35 {offsets = [8, 0], sizes = [8, 32], strides = [1, 1]} : vector<16x32xf32> to vector<8x32xf32>
    %40 = tpu.concatenate %38, %38, %38, %38, %39, %39, %39, %39 in 0 : vector<8x32xf32>, vector<8x32xf32>, vector<8x32xf32>, vector<8x32xf32>, vector<8x32xf32>, vector<8x32xf32>, vector<8x32xf32>, vector<8x32xf32> -> vector<64x32xf32>
    %41 = arith.mulf %40, %8 : vector<64x32xf32>
    %cst_14 = arith.constant dense<0.000000e+00> : vector<16x64xf32>
    %42 = tpu.matmul %28, %41, %cst_14 {dimension_numbers = #tpu.dot_dimension_numbers<[1], [1], [0], [0], [0, 0, 1, 0], [], []>} : vector<16x32xf32>, vector<64x32xf32>, vector<16x64xf32> -> vector<16x64xf32>
    %c0_15 = arith.constant 0 : index
    %c0_16 = arith.constant 0 : index
    %c0_17 = arith.constant 0 : index
    %43 = vector.load %arg6[%c0_15, %c0_16, %c0_17] : memref<2x16x64xf32, #tpu.memory_space<vmem>>, vector<1x16x64xf32>
    %44 = vector.shape_cast %43 : vector<1x16x64xf32> to vector<16x64xf32>
    %45 = arith.mulf %42, %44 : vector<16x64xf32>
    %46 = vector.extract_strided_slice %36 {offsets = [0, 0], sizes = [8, 32], strides = [1, 1]} : vector<16x32xf32> to vector<8x32xf32>
    %47 = vector.extract_strided_slice %36 {offsets = [8, 0], sizes = [8, 32], strides = [1, 1]} : vector<16x32xf32> to vector<8x32xf32>
    %48 = tpu.concatenate %46, %46, %46, %46, %47, %47, %47, %47 in 0 : vector<8x32xf32>, vector<8x32xf32>, vector<8x32xf32>, vector<8x32xf32>, vector<8x32xf32>, vector<8x32xf32>, vector<8x32xf32>, vector<8x32xf32> -> vector<64x32xf32>
    %49 = arith.mulf %48, %8 : vector<64x32xf32>
    %cst_18 = arith.constant dense<0.000000e+00> : vector<16x32xf32>
    %50 = tpu.matmul %45, %49, %cst_18 {dimension_numbers = #tpu.dot_dimension_numbers<[1], [0], [0], [1], [0, 0, 1, 1], [], []>} : vector<16x64xf32>, vector<64x32xf32>, vector<16x32xf32> -> vector<16x32xf32>
    %51 = arith.mulf %50, %50 : vector<16x32xf32>
    %cst_19 = arith.constant dense<0.000000e+00> : vector<16xf32>
    %52 = vector.multi_reduction <add>, %51, %cst_19 [1] : vector<16x32xf32> to vector<16xf32>
    %53 = vector.shape_cast %52 : vector<16xf32> to vector<16x1xf32>
    %cst_20 = arith.constant 3.200000e+01 : f32
    %54 = vector.broadcast %cst_20 : f32 to vector<16x1xf32>
    %55 = arith.divf %53, %54 : vector<16x1xf32>
    %cst_21 = arith.constant 9.99999997E-7 : f32
    %56 = vector.broadcast %cst_21 : f32 to vector<16x1xf32>
    %57 = arith.addf %55, %56 : vector<16x1xf32>
    %58 = math.rsqrt %57 : vector<16x1xf32>
    %59 = vector.broadcast %58 : vector<16x1xf32> to vector<16x32xf32>
    %60 = arith.mulf %50, %59 : vector<16x32xf32>
    %61 = arith.mulf %60, %37 : vector<16x32xf32>
    %c0_22 = arith.constant 0 : index
    %c0_23 = arith.constant 0 : index
    %c0_24 = arith.constant 0 : index
    %62 = vector.load %arg3[%c0_22, %c0_23, %c0_24] : memref<2x32x32xf32, #tpu.memory_space<vmem>>, vector<1x32x32xf32>
    %63 = vector.shape_cast %62 : vector<1x32x32xf32> to vector<32x32xf32>
    %cst_25 = arith.constant dense<0.000000e+00> : vector<16x32xf32>
    %64 = tpu.matmul %61, %63, %cst_25 {dimension_numbers = #tpu.dot_dimension_numbers<[1], [0], [0], [1], [0, 0, 1, 1], [], []>} : vector<16x32xf32>, vector<32x32xf32>, vector<16x32xf32> -> vector<16x32xf32>
    %65 = arith.addf %7, %64 : vector<16x32xf32>
    %66 = arith.mulf %65, %65 : vector<16x32xf32>
    %cst_26 = arith.constant dense<0.000000e+00> : vector<16xf32>
    %67 = vector.multi_reduction <add>, %66, %cst_26 [1] : vector<16x32xf32> to vector<16xf32>
    %68 = vector.shape_cast %67 : vector<16xf32> to vector<16x1xf32>
    %cst_27 = arith.constant 3.200000e+01 : f32
    %69 = vector.broadcast %cst_27 : f32 to vector<16x1xf32>
    %70 = arith.divf %68, %69 : vector<16x1xf32>
    %cst_28 = arith.constant 9.99999997E-7 : f32
    %71 = vector.broadcast %cst_28 : f32 to vector<16x1xf32>
    %72 = arith.addf %70, %71 : vector<16x1xf32>
    %73 = math.rsqrt %72 : vector<16x1xf32>
    %74 = vector.broadcast %73 : vector<16x1xf32> to vector<16x32xf32>
    %75 = arith.mulf %65, %74 : vector<16x32xf32>
    %c0_29 = arith.constant 0 : index
    %c0_30 = arith.constant 0 : index
    %c0_31 = arith.constant 0 : index
    %76 = vector.load %arg4[%c0_29, %c0_30, %c0_31] : memref<2x32x128xf32, #tpu.memory_space<vmem>>, vector<1x32x128xf32>
    %77 = vector.shape_cast %76 : vector<1x32x128xf32> to vector<32x128xf32>
    %cst_32 = arith.constant dense<0.000000e+00> : vector<16x128xf32>
    %78 = tpu.matmul %75, %77, %cst_32 {dimension_numbers = #tpu.dot_dimension_numbers<[1], [0], [0], [1], [0, 0, 1, 1], [], []>} : vector<16x32xf32>, vector<32x128xf32>, vector<16x128xf32> -> vector<16x128xf32>
    %79 = vector.extract_strided_slice %78 {offsets = [0, 0], sizes = [16, 64], strides = [1, 1]} : vector<16x128xf32> to vector<16x64xf32>
    %80 = vector.extract_strided_slice %78 {offsets = [0, 64], sizes = [16, 64], strides = [1, 1]} : vector<16x128xf32> to vector<16x64xf32>
    %81 = arith.mulf %79, %80 : vector<16x64xf32>
    %c0_33 = arith.constant 0 : index
    %c0_34 = arith.constant 0 : index
    %c0_35 = arith.constant 0 : index
    %82 = vector.load %arg5[%c0_33, %c0_34, %c0_35] : memref<2x64x32xf32, #tpu.memory_space<vmem>>, vector<1x64x32xf32>
    %83 = vector.shape_cast %82 : vector<1x64x32xf32> to vector<64x32xf32>
    %cst_36 = arith.constant dense<0.000000e+00> : vector<16x32xf32>
    %84 = tpu.matmul %81, %83, %cst_36 {dimension_numbers = #tpu.dot_dimension_numbers<[1], [0], [0], [1], [0, 0, 1, 1], [], []>} : vector<16x64xf32>, vector<64x32xf32>, vector<16x32xf32> -> vector<16x32xf32>
    %85 = arith.addf %65, %84 : vector<16x32xf32>
    %86 = arith.mulf %85, %85 : vector<16x32xf32>
    %cst_37 = arith.constant dense<0.000000e+00> : vector<16xf32>
    %87 = vector.multi_reduction <add>, %86, %cst_37 [1] : vector<16x32xf32> to vector<16xf32>
    %88 = vector.shape_cast %87 : vector<16xf32> to vector<16x1xf32>
    %cst_38 = arith.constant 3.200000e+01 : f32
    %89 = vector.broadcast %cst_38 : f32 to vector<16x1xf32>
    %90 = arith.divf %88, %89 : vector<16x1xf32>
    %cst_39 = arith.constant 9.99999997E-7 : f32
    %91 = vector.broadcast %cst_39 : f32 to vector<16x1xf32>
    %92 = arith.addf %90, %91 : vector<16x1xf32>
    %93 = math.rsqrt %92 : vector<16x1xf32>
    %94 = vector.broadcast %93 : vector<16x1xf32> to vector<16x32xf32>
    %95 = arith.mulf %85, %94 : vector<16x32xf32>
    %c1 = arith.constant 1 : index
    %c0_40 = arith.constant 0 : index
    %c0_41 = arith.constant 0 : index
    %96 = vector.load %arg2[%c1, %c0_40, %c0_41] : memref<2x32x128xf32, #tpu.memory_space<vmem>>, vector<1x32x128xf32>
    %97 = vector.shape_cast %96 : vector<1x32x128xf32> to vector<32x128xf32>
    %cst_42 = arith.constant dense<0.000000e+00> : vector<16x128xf32>
    %98 = tpu.matmul %95, %97, %cst_42 {dimension_numbers = #tpu.dot_dimension_numbers<[1], [0], [0], [1], [0, 0, 1, 1], [], []>} : vector<16x32xf32>, vector<32x128xf32>, vector<16x128xf32> -> vector<16x128xf32>
    %99 = vector.extract_strided_slice %98 {offsets = [0, 0], sizes = [16, 32], strides = [1, 1]} : vector<16x128xf32> to vector<16x32xf32>
    %100 = arith.negf %99 : vector<16x32xf32>
    %101 = math.exp %100 : vector<16x32xf32>
    %cst_43 = arith.constant 1.000000e+00 : f32
    %102 = vector.broadcast %cst_43 : f32 to vector<16x32xf32>
    %103 = arith.addf %102, %101 : vector<16x32xf32>
    %104 = arith.divf %102, %103 : vector<16x32xf32>
    %105 = arith.mulf %99, %104 : vector<16x32xf32>
    %106 = vector.extract_strided_slice %98 {offsets = [0, 32], sizes = [16, 32], strides = [1, 1]} : vector<16x128xf32> to vector<16x32xf32>
    %107 = arith.negf %106 : vector<16x32xf32>
    %108 = math.exp %107 : vector<16x32xf32>
    %cst_44 = arith.constant 1.000000e+00 : f32
    %109 = vector.broadcast %cst_44 : f32 to vector<16x32xf32>
    %110 = arith.addf %109, %108 : vector<16x32xf32>
    %111 = arith.divf %109, %110 : vector<16x32xf32>
    %112 = arith.mulf %106, %111 : vector<16x32xf32>
    %113 = vector.extract_strided_slice %98 {offsets = [0, 64], sizes = [16, 32], strides = [1, 1]} : vector<16x128xf32> to vector<16x32xf32>
    %114 = vector.extract_strided_slice %98 {offsets = [0, 96], sizes = [16, 32], strides = [1, 1]} : vector<16x128xf32> to vector<16x32xf32>
    %c0_45 = arith.constant 0 : index
    %c0_46 = arith.constant 0 : index
    %115 = vector.load %arg7[%c0_45, %c0_46] : memref<16x32xf32, #tpu.memory_space<vmem>>, vector<16x32xf32>
    %c0_47 = arith.constant 0 : index
    %c0_48 = arith.constant 0 : index
    %116 = vector.load %arg8[%c0_47, %c0_48] : memref<16x32xf32, #tpu.memory_space<vmem>>, vector<16x32xf32>
    %117 = arith.mulf %105, %115 : vector<16x32xf32>
    %118 = arith.mulf %105, %116 : vector<16x32xf32>
    %119 = tpu.concatenate %117, %118 in 1 : vector<16x32xf32>, vector<16x32xf32> -> vector<16x64xf32>
    %120 = arith.mulf %112, %115 : vector<16x32xf32>
    %121 = arith.mulf %112, %116 : vector<16x32xf32>
    %122 = tpu.concatenate %120, %121 in 1 : vector<16x32xf32>, vector<16x32xf32> -> vector<16x64xf32>
    %123 = vector.extract_strided_slice %122 {offsets = [0, 0], sizes = [8, 64], strides = [1, 1]} : vector<16x64xf32> to vector<8x64xf32>
    %124 = vector.extract_strided_slice %122 {offsets = [8, 0], sizes = [8, 64], strides = [1, 1]} : vector<16x64xf32> to vector<8x64xf32>
    %125 = tpu.concatenate %123, %123, %123, %123, %124, %124, %124, %124 in 0 : vector<8x64xf32>, vector<8x64xf32>, vector<8x64xf32>, vector<8x64xf32>, vector<8x64xf32>, vector<8x64xf32>, vector<8x64xf32>, vector<8x64xf32> -> vector<64x64xf32>
    %c0_49 = arith.constant 0 : index
    %c0_50 = arith.constant 0 : index
    %126 = vector.load %arg10[%c0_49, %c0_50] : memref<64x64xf32, #tpu.memory_space<vmem>>, vector<64x64xf32>
    %127 = arith.mulf %125, %126 : vector<64x64xf32>
    %cst_51 = arith.constant dense<0.000000e+00> : vector<16x64xf32>
    %128 = tpu.matmul %119, %127, %cst_51 {dimension_numbers = #tpu.dot_dimension_numbers<[1], [1], [0], [0], [0, 0, 1, 0], [], []>} : vector<16x64xf32>, vector<64x64xf32>, vector<16x64xf32> -> vector<16x64xf32>
    %c1_52 = arith.constant 1 : index
    %c0_53 = arith.constant 0 : index
    %c0_54 = arith.constant 0 : index
    %129 = vector.load %arg6[%c1_52, %c0_53, %c0_54] : memref<2x16x64xf32, #tpu.memory_space<vmem>>, vector<1x16x64xf32>
    %130 = vector.shape_cast %129 : vector<1x16x64xf32> to vector<16x64xf32>
    %131 = arith.mulf %128, %130 : vector<16x64xf32>
    %132 = vector.extract_strided_slice %113 {offsets = [0, 0], sizes = [8, 32], strides = [1, 1]} : vector<16x32xf32> to vector<8x32xf32>
    %133 = vector.extract_strided_slice %113 {offsets = [8, 0], sizes = [8, 32], strides = [1, 1]} : vector<16x32xf32> to vector<8x32xf32>
    %134 = tpu.concatenate %132, %132, %132, %132, %133, %133, %133, %133 in 0 : vector<8x32xf32>, vector<8x32xf32>, vector<8x32xf32>, vector<8x32xf32>, vector<8x32xf32>, vector<8x32xf32>, vector<8x32xf32>, vector<8x32xf32> -> vector<64x32xf32>
    %135 = arith.mulf %134, %8 : vector<64x32xf32>
    %cst_55 = arith.constant dense<0.000000e+00> : vector<16x32xf32>
    %136 = tpu.matmul %131, %135, %cst_55 {dimension_numbers = #tpu.dot_dimension_numbers<[1], [0], [0], [1], [0, 0, 1, 1], [], []>} : vector<16x64xf32>, vector<64x32xf32>, vector<16x32xf32> -> vector<16x32xf32>
    %137 = arith.mulf %136, %136 : vector<16x32xf32>
    %cst_56 = arith.constant dense<0.000000e+00> : vector<16xf32>
    %138 = vector.multi_reduction <add>, %137, %cst_56 [1] : vector<16x32xf32> to vector<16xf32>
    %139 = vector.shape_cast %138 : vector<16xf32> to vector<16x1xf32>
    %cst_57 = arith.constant 3.200000e+01 : f32
    %140 = vector.broadcast %cst_57 : f32 to vector<16x1xf32>
    %141 = arith.divf %139, %140 : vector<16x1xf32>
    %cst_58 = arith.constant 9.99999997E-7 : f32
    %142 = vector.broadcast %cst_58 : f32 to vector<16x1xf32>
    %143 = arith.addf %141, %142 : vector<16x1xf32>
    %144 = math.rsqrt %143 : vector<16x1xf32>
    %145 = vector.broadcast %144 : vector<16x1xf32> to vector<16x32xf32>
    %146 = arith.mulf %136, %145 : vector<16x32xf32>
    %147 = arith.mulf %146, %114 : vector<16x32xf32>
    %c1_59 = arith.constant 1 : index
    %c0_60 = arith.constant 0 : index
    %c0_61 = arith.constant 0 : index
    %148 = vector.load %arg3[%c1_59, %c0_60, %c0_61] : memref<2x32x32xf32, #tpu.memory_space<vmem>>, vector<1x32x32xf32>
    %149 = vector.shape_cast %148 : vector<1x32x32xf32> to vector<32x32xf32>
    %cst_62 = arith.constant dense<0.000000e+00> : vector<16x32xf32>
    %150 = tpu.matmul %147, %149, %cst_62 {dimension_numbers = #tpu.dot_dimension_numbers<[1], [0], [0], [1], [0, 0, 1, 1], [], []>} : vector<16x32xf32>, vector<32x32xf32>, vector<16x32xf32> -> vector<16x32xf32>
    %151 = arith.addf %85, %150 : vector<16x32xf32>
    %152 = arith.mulf %151, %151 : vector<16x32xf32>
    %cst_63 = arith.constant dense<0.000000e+00> : vector<16xf32>
    %153 = vector.multi_reduction <add>, %152, %cst_63 [1] : vector<16x32xf32> to vector<16xf32>
    %154 = vector.shape_cast %153 : vector<16xf32> to vector<16x1xf32>
    %cst_64 = arith.constant 3.200000e+01 : f32
    %155 = vector.broadcast %cst_64 : f32 to vector<16x1xf32>
    %156 = arith.divf %154, %155 : vector<16x1xf32>
    %cst_65 = arith.constant 9.99999997E-7 : f32
    %157 = vector.broadcast %cst_65 : f32 to vector<16x1xf32>
    %158 = arith.addf %156, %157 : vector<16x1xf32>
    %159 = math.rsqrt %158 : vector<16x1xf32>
    %160 = vector.broadcast %159 : vector<16x1xf32> to vector<16x32xf32>
    %161 = arith.mulf %151, %160 : vector<16x32xf32>
    %c1_66 = arith.constant 1 : index
    %c0_67 = arith.constant 0 : index
    %c0_68 = arith.constant 0 : index
    %162 = vector.load %arg4[%c1_66, %c0_67, %c0_68] : memref<2x32x128xf32, #tpu.memory_space<vmem>>, vector<1x32x128xf32>
    %163 = vector.shape_cast %162 : vector<1x32x128xf32> to vector<32x128xf32>
    %cst_69 = arith.constant dense<0.000000e+00> : vector<16x128xf32>
    %164 = tpu.matmul %161, %163, %cst_69 {dimension_numbers = #tpu.dot_dimension_numbers<[1], [0], [0], [1], [0, 0, 1, 1], [], []>} : vector<16x32xf32>, vector<32x128xf32>, vector<16x128xf32> -> vector<16x128xf32>
    %165 = vector.extract_strided_slice %164 {offsets = [0, 0], sizes = [16, 64], strides = [1, 1]} : vector<16x128xf32> to vector<16x64xf32>
    %166 = vector.extract_strided_slice %164 {offsets = [0, 64], sizes = [16, 64], strides = [1, 1]} : vector<16x128xf32> to vector<16x64xf32>
    %167 = arith.mulf %165, %166 : vector<16x64xf32>
    %c1_70 = arith.constant 1 : index
    %c0_71 = arith.constant 0 : index
    %c0_72 = arith.constant 0 : index
    %168 = vector.load %arg5[%c1_70, %c0_71, %c0_72] : memref<2x64x32xf32, #tpu.memory_space<vmem>>, vector<1x64x32xf32>
    %169 = vector.shape_cast %168 : vector<1x64x32xf32> to vector<64x32xf32>
    %cst_73 = arith.constant dense<0.000000e+00> : vector<16x32xf32>
    %170 = tpu.matmul %167, %169, %cst_73 {dimension_numbers = #tpu.dot_dimension_numbers<[1], [0], [0], [1], [0, 0, 1, 1], [], []>} : vector<16x64xf32>, vector<64x32xf32>, vector<16x32xf32> -> vector<16x32xf32>
    %171 = arith.addf %151, %170 : vector<16x32xf32>
    %172 = arith.mulf %171, %171 : vector<16x32xf32>
    %cst_74 = arith.constant dense<0.000000e+00> : vector<16xf32>
    %173 = vector.multi_reduction <add>, %172, %cst_74 [1] : vector<16x32xf32> to vector<16xf32>
    %174 = vector.shape_cast %173 : vector<16xf32> to vector<16x1xf32>
    %cst_75 = arith.constant 3.200000e+01 : f32
    %175 = vector.broadcast %cst_75 : f32 to vector<16x1xf32>
    %176 = arith.divf %174, %175 : vector<16x1xf32>
    %cst_76 = arith.constant 9.99999997E-7 : f32
    %177 = vector.broadcast %cst_76 : f32 to vector<16x1xf32>
    %178 = arith.addf %176, %177 : vector<16x1xf32>
    %179 = math.rsqrt %178 : vector<16x1xf32>
    %180 = vector.broadcast %179 : vector<16x1xf32> to vector<16x32xf32>
    %181 = arith.mulf %171, %180 : vector<16x32xf32>
    %182 = vector.extract_strided_slice %181 {offsets = [7, 0], sizes = [1, 32], strides = [1, 1]} : vector<16x32xf32> to vector<1x32xf32>
    %183 = vector.extract_strided_slice %181 {offsets = [15, 0], sizes = [1, 32], strides = [1, 1]} : vector<16x32xf32> to vector<1x32xf32>
    %184 = tpu.concatenate %182, %183 in 0 : vector<1x32xf32>, vector<1x32xf32> -> vector<2x32xf32>
    %c0_77 = arith.constant 0 : index
    %c0_78 = arith.constant 0 : index
    %185 = vector.load %arg11[%c0_77, %c0_78] : memref<32x128xf32, #tpu.memory_space<vmem>>, vector<32x128xf32>
    %cst_79 = arith.constant dense<0.000000e+00> : vector<2x128xf32>
    %186 = tpu.matmul %184, %185, %cst_79 {dimension_numbers = #tpu.dot_dimension_numbers<[1], [0], [0], [1], [0, 0, 1, 1], [], []>} : vector<2x32xf32>, vector<32x128xf32>, vector<2x128xf32> -> vector<2x128xf32>
    %c0_80 = arith.constant 0 : index
    %c0_81 = arith.constant 0 : index
    %187 = vector.load %arg12[%c0_80, %c0_81] : memref<2x128xf32, #tpu.memory_space<vmem>>, vector<2x128xf32>
    tpu.vector_store %arg12[%c0_80, %c0_81], %186 {strides = array<i32>} : memref<2x128xf32, #tpu.memory_space<vmem>>, vector<2x128xf32>,
    return
  }
}

</mosaic_0001>

<llo_original>
// kernel: tpu_custom_call.1
$region0: #{tpu_custom_call.1}
  #allocation0 [shape = 'u32[]', space=smem, size = 0x4, offset = 0x4, fixed_abs, tag = 'smem constant byte address 0x4 - core index']
  #allocation1 [shape = 'u32[144,128]{1,0:T(1,128)}', space=vmem, size = 0x12000, scoped, tag = 'internal scratch']
  %s0 = inlined_call_operand.vmem [shape: s32[16,1], index: 0, kind: input, shape index: {}]
  %s1 = inlined_call_operand.vmem [shape: f32[64,32], index: 1, kind: input, shape index: {}]
  %s2 = inlined_call_operand.vmem [shape: f32[2,32,128], index: 2, kind: input, shape index: {}]
  %s3 = inlined_call_operand.vmem [shape: f32[2,32,32], index: 3, kind: input, shape index: {}]
  %s4 = inlined_call_operand.vmem [shape: f32[2,32,128], index: 4, kind: input, shape index: {}]
  %s5 = inlined_call_operand.vmem [shape: f32[2,64,32], index: 5, kind: input, shape index: {}]
  %s6 = inlined_call_operand.vmem [shape: f32[2,16,64], index: 6, kind: input, shape index: {}]
  %s7 = inlined_call_operand.hbm [shape: f32[16,32], index: 7, kind: input, shape index: {}]
  %s8 = inlined_call_operand.hbm [shape: f32[16,32], index: 8, kind: input, shape index: {}]
  %s9 = inlined_call_operand.vmem [shape: f32[64,32], index: 9, kind: input, shape index: {}]
  %s10 = inlined_call_operand.vmem [shape: f32[64,64], index: 10, kind: input, shape index: {}]
  %s11 = inlined_call_operand.vmem [shape: f32[32,128], index: 11, kind: input, shape index: {}]
  %s12 = inlined_call_operand.hbm [shape: f32[2,128], index: 12, kind: output, shape index: {}]
  %s13 = sld [smem:[#allocation0]]
  $region66: #{tpu_custom_call.1} parent=0
    _
  %s15 = ssub.s32 1, %s13
  %s16 = scalar_select 0, %s15, %s13
  $region1: #{tpu_custom_call.1} parent=0
    #allocation2 [shape = 'u8[8192]{0}', space=vmem, size = 0x2000, scoped, tag = 'input window, operand 7, single buffered']
    #allocation3 [shape = 's32[1]{0}', space=sflag, size = 0x4, scoped, tag = 'scoped memory for tpu_custom_call.1']
    #allocation4 [shape = 's32[1]{0}', space=sflag, size = 0x4, scoped, tag = 'scoped memory for tpu_custom_call.1']
    #allocation5 [shape = 'u8[8192]{0}', space=vmem, size = 0x2000, scoped, tag = 'input window, operand 8, single buffered']
    #allocation6 [shape = 's32[1]{0}', space=sflag, size = 0x4, scoped, tag = 'scoped memory for tpu_custom_call.1']
    #allocation7 [shape = 'u8[1024]{0}', space=vmem, size = 0x400, scoped, tag = 'output window, operand 0, single buffered']
    %17 = vsyncpa [#allocation3], 0
    %18 = vsyncpa [#allocation6], 0
    %19 = vsyncpa [#allocation4], 0
    // Predicated region
    $region2: #{tpu_custom_call.1} parent=1 // pred_check
      _
    $region3: #{tpu_custom_call.1} parent=1 // pred_check_branch
      %21 = sbr.rel (0) target = $region5
    $region4: #{tpu_custom_call.1} parent=1 // pred_region
      _
    $region5: #{tpu_custom_call.1} parent=1 // pred_fallthru
      _
    // Predicated region
    $region6: #{tpu_custom_call.1} parent=1 // pred_check
      _
    $region7: #{tpu_custom_call.1} parent=1 // pred_check_branch
      %23 = sbr.rel (0) target = $region9
    $region8: #{tpu_custom_call.1} parent=1 // pred_region
      _
    $region9: #{tpu_custom_call.1} parent=1 // pred_fallthru
      _
    // Predicated region
    $region10: #{tpu_custom_call.1} parent=1 // pred_check
      _
    $region11: #{tpu_custom_call.1} parent=1 // pred_check_branch
      %25 = sbr.rel (0) target = $region13
    $region12: #{tpu_custom_call.1} parent=1 // pred_region
      _
    $region13: #{tpu_custom_call.1} parent=1 // pred_fallthru
      _
    // Predicated region
    $region14: #{tpu_custom_call.1} parent=1 // pred_check
      _
    $region15: #{tpu_custom_call.1} parent=1 // pred_check_branch
      %27 = sbr.rel (0) target = $region17
    $region16: #{tpu_custom_call.1} parent=1 // pred_region
      _
    $region17: #{tpu_custom_call.1} parent=1 // pred_fallthru
      _
    // Predicated region
    $region18: #{tpu_custom_call.1} parent=1 // pred_check
      _
    $region19: #{tpu_custom_call.1} parent=1 // pred_check_branch
      %29 = sbr.rel (0) target = $region21
    $region20: #{tpu_custom_call.1} parent=1 // pred_region
      _
    $region21: #{tpu_custom_call.1} parent=1 // pred_fallthru
      _
    // Predicated region
    $region22: #{tpu_custom_call.1} parent=1 // pred_check
      _
    $region23: #{tpu_custom_call.1} parent=1 // pred_check_branch
      %31 = sbr.rel (0) target = $region25
    $region24: #{tpu_custom_call.1} parent=1 // pred_region
      _
    $region25: #{tpu_custom_call.1} parent=1 // pred_fallthru
      _
    // Predicated region
    $region26: #{tpu_custom_call.1} parent=1 // pred_check
      _
    $region27: #{tpu_custom_call.1} parent=1 // pred_check_branch
      %33 = sbr.rel (0) target = $region29
    $region28: #{tpu_custom_call.1} parent=1 // pred_region
      _
    $region29: #{tpu_custom_call.1} parent=1 // pred_fallthru
      _
    // Predicated region
    $region30: #{tpu_custom_call.1} parent=1 // pred_check
      _
    $region31: #{tpu_custom_call.1} parent=1 // pred_check_branch
      %35 = sbr.rel (0) target = $region33
    $region32: #{tpu_custom_call.1} parent=1 // pred_region
      %s37 = ssub.s32 256, 256
      %38 = vsyncadd [#allocation3], %s37
      %s39 = sshll.u32 [#allocation2], 4
      %s40 = int_to_ptr.vmem [resolvable:$true] %s39
      %45 = dma.hbm_to_vmem [thread:$0]  %s7, 256, %s40, [#allocation3], 128, 128, 8
    $region33: #{tpu_custom_call.1} parent=1 // pred_fallthru
      _
    // Predicated region
    $region34: #{tpu_custom_call.1} parent=1 // pred_check
      _
    $region35: #{tpu_custom_call.1} parent=1 // pred_check_branch
      %47 = sbr.rel (0) target = $region37
    $region36: #{tpu_custom_call.1} parent=1 // pred_region
      %s49 = ssub.s32 256, 256
      %50 = vsyncadd [#allocation6], %s49
      %s51 = sshll.u32 [#allocation5], 4
      %s52 = int_to_ptr.vmem [resolvable:$true] %s51
      %57 = dma.hbm_to_vmem [thread:$0]  %s8, 256, %s52, [#allocation6], 128, 128, 8
    $region37: #{tpu_custom_call.1} parent=1 // pred_fallthru
      _
    // Predicated region
    $region38: #{tpu_custom_call.1} parent=1 // pred_check
      _
    $region39: #{tpu_custom_call.1} parent=1 // pred_check_branch
      %59 = sbr.rel (0) target = $region41
    $region40: #{tpu_custom_call.1} parent=1 // pred_region
      _
    $region41: #{tpu_custom_call.1} parent=1 // pred_fallthru
      _
    // Predicated region
    $region42: #{tpu_custom_call.1} parent=1 // pred_check
      _
    $region43: #{tpu_custom_call.1} parent=1 // pred_check_branch
      %61 = sbr.rel (0) target = $region45
    $region44: #{tpu_custom_call.1} parent=1 // pred_region
      _
    $region45: #{tpu_custom_call.1} parent=1 // pred_fallthru
      _
    // Predicated region
    $region46: #{tpu_custom_call.1} parent=1 // pred_check
      _
    $region47: #{tpu_custom_call.1} parent=1 // pred_check_branch
      %63 = sbr.rel (0) target = $region49
    $region48: #{tpu_custom_call.1} parent=1 // pred_region
      _
    $region49: #{tpu_custom_call.1} parent=1 // pred_fallthru
      _
    // Predicated region
    $region50: #{tpu_custom_call.1} parent=1 // pred_check
      _
    $region51: #{tpu_custom_call.1} parent=1 // pred_check_branch
      %65 = sbr.rel (0) target = $region53
    $region52: #{tpu_custom_call.1} parent=1 // pred_region
      %66 = dma.done [#allocation3], 256
    $region53: #{tpu_custom_call.1} parent=1 // pred_fallthru
      _
    // Predicated region
    $region54: #{tpu_custom_call.1} parent=1 // pred_check
      _
    $region55: #{tpu_custom_call.1} parent=1 // pred_check_branch
      %68 = sbr.rel (0) target = $region57
    $region56: #{tpu_custom_call.1} parent=1 // pred_region
      %69 = dma.done [#allocation6], 256
    $region57: #{tpu_custom_call.1} parent=1 // pred_fallthru
      _
    %v70 = vld [vmem:[%s0] sm:$0xff]
    %v71 = vld [vmem:[%s0 + $0x8] sm:$0xff]
    %v72 = vlaneseq
    %v73 = vand.u32 %v72, 127
    %74 = vset.pattern.permute.xlu0 0
    %75 = vperm.xlu0 %74, %v70
    %v76 = vpop.permute.xlu0 %75
    %77 = vset.pattern.permute.xlu0 0
    %78 = vperm.xlu0 %77, %v71
    %v79 = vpop.permute.xlu0 %78
    %vm80 = vcmp.eq.s32.totalorder %v73, %v76
    %vm81 = vcmp.eq.s32.totalorder %v73, %v79
    %v82 = vsel %vm80, 1, 0
    %v83 = vsel %vm81, 1, 0
    %v84 = vcvt.s32.f32 %v82
    %v85 = vcvt.s32.f32 %v83
    %v86 = vld [vmem:[%s1] sm:$0xff]
    %v87 = vld [vmem:[%s1 + $0x8] sm:$0xff]
    %v88 = vld [vmem:[%s1 + $0x10] sm:$0xff]
    %v89 = vld [vmem:[%s1 + $0x18] sm:$0xff]
    %v90 = vld [vmem:[%s1 + $0x20] sm:$0xff]
    %v91 = vld [vmem:[%s1 + $0x28] sm:$0xff]
    %v92 = vld [vmem:[%s1 + $0x30] sm:$0xff]
    %v93 = vld [vmem:[%s1 + $0x38] sm:$0xff]
    %vm94 = vcmask 523264
    %v96 = vsel %vm94, %v84, 0
    %v99 = vsel %vm94, %v85, 0
    %101 = vmatprep.subr.mxu0 0.0
    %102 = vmatpush1.msra.mxu0 0.0
    %103 = vmatprep.subr.mxu0 0.0
    %104 = vmatpush1.msra.mxu0 0.0
    %105 = vmatprep.subr.mxu0 0.0
    %106 = vmatpush1.msra.mxu0 0.0
    %107 = vmatprep.subr.mxu0 0.0
    %108 = vmatpush1.msra.mxu0 0.0
    %109 = vmatprep.subr.mxu0 0.0
    %110 = vmatpush1.msra.mxu0 0.0
    %111 = vmatprep.subr.mxu0 0.0
    %112 = vmatpush1.msra.mxu0 0.0
    %113 = vmatprep.subr.mxu0 0.0
    %114 = vmatpush1.msra.mxu0 0.0
    %115 = vmatprep.subr.mxu0 0.0
    %116 = vmatpush1.msra.mxu0 0.0
    %117 = vmatprep.subr.mxu0 0.0
    %118 = vmatpush1.msra.mxu0 %v93
    %119 = vmatprep.subr.mxu0 0.0
    %120 = vmatpush1.msra.mxu0 %v92
    %121 = vmatprep.subr.mxu0 0.0
    %122 = vmatpush1.msra.mxu0 %v91
    %123 = vmatprep.subr.mxu0 0.0
    %124 = vmatpush1.msra.mxu0 %v90
    %125 = vmatprep.subr.mxu0 0.0
    %126 = vmatpush1.msra.mxu0 %v89
    %127 = vmatprep.subr.mxu0 0.0
    %128 = vmatpush1.msra.mxu0 %v88
    %129 = vmatprep.subr.mxu0 0.0
    %130 = vmatpush1.msra.mxu0 %v87
    %131 = vmatprep.subr.mxu0 0.0
    %132 = vmatpush1.msra.mxu0 %v86
    %133 = vmatprep.subr.mxu0 0.0
    %134 = vmatpush2.msra.mxu0 0.0
    %135 = vmatprep.subr.mxu0 0.0
    %136 = vmatpush2.msra.mxu0 0.0
    %137 = vmatprep.subr.mxu0 0.0
    %138 = vmatpush2.msra.mxu0 0.0
    %139 = vmatprep.subr.mxu0 0.0
    %140 = vmatpush2.msra.mxu0 0.0
    %141 = vmatprep.subr.mxu0 0.0
    %142 = vmatpush2.msra.mxu0 0.0
    %143 = vmatprep.subr.mxu0 0.0
    %144 = vmatpush2.msra.mxu0 0.0
    %145 = vmatprep.subr.mxu0 0.0
    %146 = vmatpush2.msra.mxu0 0.0
    %147 = vmatprep.subr.mxu0 0.0
    %148 = vmatpush2.msra.mxu0 0.0
    %149 = vmatprep.subr.mxu0 0.0
    %150 = vmatpush2.msra.mxu0 0.0
    %151 = vmatprep.subr.mxu0 0.0
    %152 = vmatpush2.msra.mxu0 0.0
    %153 = vmatprep.subr.mxu0 0.0
    %154 = vmatpush2.msra.mxu0 0.0
    %155 = vmatprep.subr.mxu0 0.0
    %156 = vmatpush2.msra.mxu0 0.0
    %157 = vmatprep.subr.mxu0 0.0
    %158 = vmatpush2.msra.mxu0 0.0
    %159 = vmatprep.subr.mxu0 0.0
    %160 = vmatpush2.msra.mxu0 0.0
    %161 = vmatprep.subr.mxu0 0.0
    %162 = vmatpush2.msra.mxu0 0.0
    %163 = vmatprep.subr.mxu0 0.0
    %164 = vmatpush2.msra.mxu0 0.0
    %165 = vmatprep.mubr.f32.mxu0 0.0
    %166 = vmatmul.mubr.f32.gmra.mxu0 %v96
    %v167 = vpop.f32.mrf.mxu0
    %v168 = vadd.f32 0.0, %v167
    %v169 = vpop.f32.mrf.mxu0
    %170 = vmatprep.mubr.f32.mxu0 0.0
    %171 = vmatmul.mubr.f32.gmra.mxu0 %v99
    %v172 = vpop.f32.mrf.mxu0
    %v173 = vadd.f32 0.0, %v172
    %v174 = vpop.f32.mrf.mxu0
    %175 = vdwg.mxu0
    %v176 = vld [vmem:[%s9] sm:$0xff]
    %v177 = vld [vmem:[%s9 + $0x8] sm:$0xff]
    %v178 = vld [vmem:[%s9 + $0x10] sm:$0xff]
    %v179 = vld [vmem:[%s9 + $0x18] sm:$0xff]
    %v180 = vld [vmem:[%s9 + $0x20] sm:$0xff]
    %v181 = vld [vmem:[%s9 + $0x28] sm:$0xff]
    %v182 = vld [vmem:[%s9 + $0x30] sm:$0xff]
    %v183 = vld [vmem:[%s9 + $0x38] sm:$0xff]
    %v184 = vmul.f32 %v168, %v168
    %v185 = vmul.f32 %v173, %v173
    %vm186 = vcmask 261120
    %v187 = vsel %vm186, %v184, 0.0
    %188 = vadd.xlane.f32.xlu0 %v187
    %v189 = vpop.xlane.xlu0 %188
    %v190 = vsel %vm186, %v185, 0.0
    %191 = vadd.xlane.f32.xlu0 %v190
    %v192 = vpop.xlane.xlu0 %191
    %v193 = vrcp.pop 32.0
    %v194 = vmul.f32 %v189, %v193
    %v195 = vmul.f32 %v192, %v193
    %v196 = vadd.f32 %v194, 1e-06
    %v197 = vadd.f32 %v195, 1e-06
    %v198 = vrsqrt.pop %v196
    %v199 = vrsqrt.pop %v197
    %v200 = vmul.f32 %v168, %v198
    %v201 = vmul.f32 %v173, %v199
    %v202 = vld [vmem:[%s2] sm:$0xff]
    %v203 = vld [vmem:[%s2 + $0x8] sm:$0xff]
    %v204 = vld [vmem:[%s2 + $0x10] sm:$0xff]
    %v205 = vld [vmem:[%s2 + $0x18] sm:$0xff]
    %v207 = vsel %vm186, %v200, 0
    %v210 = vsel %vm186, %v201, 0
    %212 = vmatprep.subr.mxu0 0.0
    %213 = vmatpush1.msra.mxu0 0.0
    %214 = vmatprep.subr.mxu0 0.0
    %215 = vmatpush1.msra.mxu0 0.0
    %216 = vmatprep.subr.mxu0 0.0
    %217 = vmatpush1.msra.mxu0 0.0
    %218 = vmatprep.subr.mxu0 0.0
    %219 = vmatpush1.msra.mxu0 0.0
    %220 = vmatprep.subr.mxu0 0.0
    %221 = vmatpush1.msra.mxu0 0.0
    %222 = vmatprep.subr.mxu0 0.0
    %223 = vmatpush1.msra.mxu0 0.0
    %224 = vmatprep.subr.mxu0 0.0
    %225 = vmatpush1.msra.mxu0 0.0
    %226 = vmatprep.subr.mxu0 0.0
    %227 = vmatpush1.msra.mxu0 0.0
    %228 = vmatprep.subr.mxu0 0.0
    %229 = vmatpush1.msra.mxu0 0.0
    %230 = vmatprep.subr.mxu0 0.0
    %231 = vmatpush1.msra.mxu0 0.0
    %232 = vmatprep.subr.mxu0 0.0
    %233 = vmatpush1.msra.mxu0 0.0
    %234 = vmatprep.subr.mxu0 0.0
    %235 = vmatpush1.msra.mxu0 0.0
    %236 = vmatprep.subr.mxu0 0.0
    %237 = vmatpush1.msra.mxu0 %v205
    %238 = vmatprep.subr.mxu0 0.0
    %239 = vmatpush1.msra.mxu0 %v204
    %240 = vmatprep.subr.mxu0 0.0
    %241 = vmatpush1.msra.mxu0 %v203
    %242 = vmatprep.subr.mxu0 0.0
    %243 = vmatpush1.msra.mxu0 %v202
    %244 = vmatprep.subr.mxu0 0.0
    %245 = vmatpush2.msra.mxu0 0.0
    %246 = vmatprep.subr.mxu0 0.0
    %247 = vmatpush2.msra.mxu0 0.0
    %248 = vmatprep.subr.mxu0 0.0
    %249 = vmatpush2.msra.mxu0 0.0
    %250 = vmatprep.subr.mxu0 0.0
    %251 = vmatpush2.msra.mxu0 0.0
    %252 = vmatprep.subr.mxu0 0.0
    %253 = vmatpush2.msra.mxu0 0.0
    %254 = vmatprep.subr.mxu0 0.0
    %255 = vmatpush2.msra.mxu0 0.0
    %256 = vmatprep.subr.mxu0 0.0
    %257 = vmatpush2.msra.mxu0 0.0
    %258 = vmatprep.subr.mxu0 0.0
    %259 = vmatpush2.msra.mxu0 0.0
    %260 = vmatprep.subr.mxu0 0.0
    %261 = vmatpush2.msra.mxu0 0.0
    %262 = vmatprep.subr.mxu0 0.0
    %263 = vmatpush2.msra.mxu0 0.0
    %264 = vmatprep.subr.mxu0 0.0
    %265 = vmatpush2.msra.mxu0 0.0
    %266 = vmatprep.subr.mxu0 0.0
    %267 = vmatpush2.msra.mxu0 0.0
    %268 = vmatprep.subr.mxu0 0.0
    %269 = vmatpush2.msra.mxu0 0.0
    %270 = vmatprep.subr.mxu0 0.0
    %271 = vmatpush2.msra.mxu0 0.0
    %272 = vmatprep.subr.mxu0 0.0
    %273 = vmatpush2.msra.mxu0 0.0
    %274 = vmatprep.subr.mxu0 0.0
    %275 = vmatpush2.msra.mxu0 0.0
    %276 = vmatprep.mubr.f32.mxu0 0.0
    %277 = vmatmul.mubr.f32.gmra.mxu0 %v207
    %v278 = vpop.f32.mrf.mxu0
    %v279 = vadd.f32 0.0, %v278
    %v280 = vpop.f32.mrf.mxu0
    %281 = vmatprep.mubr.f32.mxu0 0.0
    %282 = vmatmul.mubr.f32.gmra.mxu0 %v210
    %v283 = vpop.f32.mrf.mxu0
    %v284 = vadd.f32 0.0, %v283
    %v285 = vpop.f32.mrf.mxu0
    %286 = vdwg.mxu0
    %v287 = vxor.u32 %v279, 2147483648
    %v288 = vxor.u32 %v284, 2147483648
    %v289 = vmul.f32 %v287, 1.442695
    %v290 = vpow.pop %v289
    %v291 = vmul.f32 %v288, 1.442695
    %v292 = vpow.pop %v291
    %v293 = vadd.f32 %v290, 1.0
    %v294 = vadd.f32 %v292, 1.0
    %v295 = vrcp.pop %v293
    %v296 = vmul.f32 1.0, %v295
    %v297 = vrcp.pop %v294
    %v298 = vmul.f32 1.0, %v297
    %v299 = vmul.f32 %v279, %v296
    %v300 = vmul.f32 %v284, %v298
    %309 = vrot.lane.b32.xlu0 %v176, 32
    %v310 = vpop.permute.xlu0 %309
    %311 = vrot.lane.b32.xlu0 %v177, 32
    %v312 = vpop.permute.xlu0 %311
    %313 = vrot.lane.b32.xlu0 %v178, 32
    %v314 = vpop.permute.xlu0 %313
    %315 = vrot.lane.b32.xlu0 %v179, 32
    %v316 = vpop.permute.xlu0 %315
    %317 = vrot.lane.b32.xlu0 %v180, 32
    %v318 = vpop.permute.xlu0 %317
    %319 = vrot.lane.b32.xlu0 %v181, 32
    %v320 = vpop.permute.xlu0 %319
    %321 = vrot.lane.b32.xlu0 %v182, 32
    %v322 = vpop.permute.xlu0 %321
    %323 = vrot.lane.b32.xlu0 %v183, 32
    %v324 = vpop.permute.xlu0 %323
    %v333 = vmul.f32 %v299, %v310
    %v334 = vmul.f32 %v299, %v312
    %v335 = vmul.f32 %v299, %v314
    %v336 = vmul.f32 %v299, %v316
    %v337 = vmul.f32 %v300, %v318
    %v338 = vmul.f32 %v300, %v320
    %v339 = vmul.f32 %v300, %v322
    %v340 = vmul.f32 %v300, %v324
    %349 = vrot.lane.b32.xlu0 %v333, 96
    %v350 = vpop.permute.xlu0 %349
    %351 = vrot.lane.b32.xlu0 %v334, 96
    %v352 = vpop.permute.xlu0 %351
    %353 = vrot.lane.b32.xlu0 %v335, 96
    %v354 = vpop.permute.xlu0 %353
    %355 = vrot.lane.b32.xlu0 %v336, 96
    %v356 = vpop.permute.xlu0 %355
    %357 = vrot.lane.b32.xlu0 %v337, 96
    %v358 = vpop.permute.xlu0 %357
    %359 = vrot.lane.b32.xlu0 %v338, 96
    %v360 = vpop.permute.xlu0 %359
    %361 = vrot.lane.b32.xlu0 %v339, 96
    %v362 = vpop.permute.xlu0 %361
    %363 = vrot.lane.b32.xlu0 %v340, 96
    %v364 = vpop.permute.xlu0 %363
    %v366 = vsel %vm186, %v299, 0
    %v369 = vsel %vm186, %v300, 0
    %v371 = vsel %vm186, %v350, 0
    %v373 = vsel %vm186, %v352, 0
    %v375 = vsel %vm186, %v354, 0
    %v377 = vsel %vm186, %v356, 0
    %v379 = vsel %vm186, %v358, 0
    %v381 = vsel %vm186, %v360, 0
    %v383 = vsel %vm186, %v362, 0
    %v385 = vsel %vm186, %v364, 0
    %387 = vmatprep.subr.mxu0 0.0
    %388 = vmatpush1.xpose.msra.mxu0 0.0
    %389 = vmatprep.subr.mxu0 0.0
    %390 = vmatpush1.xpose.msra.mxu0 0.0
    %391 = vmatprep.subr.mxu0 0.0
    %392 = vmatpush1.xpose.msra.mxu0 0.0
    %393 = vmatprep.subr.mxu0 0.0
    %394 = vmatpush1.xpose.msra.mxu0 0.0
    %395 = vmatprep.subr.mxu0 0.0
    %396 = vmatpush1.xpose.msra.mxu0 0.0
    %397 = vmatprep.subr.mxu0 0.0
    %398 = vmatpush1.xpose.msra.mxu0 0.0
    %399 = vmatprep.subr.mxu0 0.0
    %400 = vmatpush1.xpose.msra.mxu0 0.0
    %401 = vmatprep.subr.mxu0 0.0
    %402 = vmatpush1.xpose.msra.mxu0 0.0
    %403 = vmatprep.subr.mxu0 0.0
    %404 = vmatpush1.xpose.msra.mxu0 %v385
    %405 = vmatprep.subr.mxu0 0.0
    %406 = vmatpush1.xpose.msra.mxu0 %v383
    %407 = vmatprep.subr.mxu0 0.0
    %408 = vmatpush1.xpose.msra.mxu0 %v381
    %409 = vmatprep.subr.mxu0 0.0
    %410 = vmatpush1.xpose.msra.mxu0 %v379
    %411 = vmatprep.subr.mxu0 0.0
    %412 = vmatpush1.xpose.msra.mxu0 %v377
    %413 = vmatprep.subr.mxu0 0.0
    %414 = vmatpush1.xpose.msra.mxu0 %v375
    %415 = vmatprep.subr.mxu0 0.0
    %416 = vmatpush1.xpose.msra.mxu0 %v373
    %417 = vmatprep.subr.mxu0 0.0
    %418 = vmatpush1.xpose.msra.mxu0 %v371
    %419 = vmatprep.subr.mxu0 0.0
    %420 = vmatpush2.xpose.msra.mxu0 0.0
    %421 = vmatprep.subr.mxu0 0.0
    %422 = vmatpush2.xpose.msra.mxu0 0.0
    %423 = vmatprep.subr.mxu0 0.0
    %424 = vmatpush2.xpose.msra.mxu0 0.0
    %425 = vmatprep.subr.mxu0 0.0
    %426 = vmatpush2.xpose.msra.mxu0 0.0
    %427 = vmatprep.subr.mxu0 0.0
    %428 = vmatpush2.xpose.msra.mxu0 0.0
    %429 = vmatprep.subr.mxu0 0.0
    %430 = vmatpush2.xpose.msra.mxu0 0.0
    %431 = vmatprep.subr.mxu0 0.0
    %432 = vmatpush2.xpose.msra.mxu0 0.0
    %433 = vmatprep.subr.mxu0 0.0
    %434 = vmatpush2.xpose.msra.mxu0 0.0
    %435 = vmatprep.subr.mxu0 0.0
    %436 = vmatpush2.xpose.msra.mxu0 0.0
    %437 = vmatprep.subr.mxu0 0.0
    %438 = vmatpush2.xpose.msra.mxu0 0.0
    %439 = vmatprep.subr.mxu0 0.0
    %440 = vmatpush2.xpose.msra.mxu0 0.0
    %441 = vmatprep.subr.mxu0 0.0
    %442 = vmatpush2.xpose.msra.mxu0 0.0
    %443 = vmatprep.subr.mxu0 0.0
    %444 = vmatpush2.xpose.msra.mxu0 0.0
    %445 = vmatprep.subr.mxu0 0.0
    %446 = vmatpush2.xpose.msra.mxu0 0.0
    %447 = vmatprep.subr.mxu0 0.0
    %448 = vmatpush2.xpose.msra.mxu0 0.0
    %449 = vmatprep.subr.mxu0 0.0
    %450 = vmatpush2.xpose.msra.mxu0 0.0
    %451 = vmatprep.mubr.f32.mxu0 0.0
    %452 = vmatmul.mubr.f32.gmra.mxu0 %v366
    %v453 = vpop.f32.mrf.mxu0
    %v454 = vadd.f32 0.0, %v453
    %v455 = vpop.f32.mrf.mxu0
    %456 = vmatprep.mubr.f32.mxu0 0.0
    %457 = vmatmul.mubr.f32.gmra.mxu0 %v369
    %v458 = vpop.f32.mrf.mxu0
    %v459 = vadd.f32 0.0, %v458
    %v460 = vpop.f32.mrf.mxu0
    %461 = vdwg.mxu0
    %v462 = vld [vmem:[%s6] sm:$0xff]
    %v463 = vld [vmem:[%s6 + $0x8] sm:$0xff]
    %v464 = vmul.f32 %v454, %v462
    %v465 = vmul.f32 %v459, %v463
    %466 = vrot.lane.b32.xlu0 %v176, 64
    %v467 = vpop.permute.xlu0 %466
    %468 = vrot.lane.b32.xlu0 %v177, 64
    %v469 = vpop.permute.xlu0 %468
    %470 = vrot.lane.b32.xlu0 %v178, 64
    %v471 = vpop.permute.xlu0 %470
    %472 = vrot.lane.b32.xlu0 %v179, 64
    %v473 = vpop.permute.xlu0 %472
    %474 = vrot.lane.b32.xlu0 %v180, 64
    %v475 = vpop.permute.xlu0 %474
    %476 = vrot.lane.b32.xlu0 %v181, 64
    %v477 = vpop.permute.xlu0 %476
    %478 = vrot.lane.b32.xlu0 %v182, 64
    %v479 = vpop.permute.xlu0 %478
    %480 = vrot.lane.b32.xlu0 %v183, 64
    %v481 = vpop.permute.xlu0 %480
    %v490 = vmul.f32 %v279, %v467
    %v491 = vmul.f32 %v279, %v469
    %v492 = vmul.f32 %v279, %v471
    %v493 = vmul.f32 %v279, %v473
    %v494 = vmul.f32 %v284, %v475
    %v495 = vmul.f32 %v284, %v477
    %v496 = vmul.f32 %v284, %v479
    %v497 = vmul.f32 %v284, %v481
    %506 = vrot.lane.b32.xlu0 %v490, 64
    %v507 = vpop.permute.xlu0 %506
    %508 = vrot.lane.b32.xlu0 %v491, 64
    %v509 = vpop.permute.xlu0 %508
    %510 = vrot.lane.b32.xlu0 %v492, 64
    %v511 = vpop.permute.xlu0 %510
    %512 = vrot.lane.b32.xlu0 %v493, 64
    %v513 = vpop.permute.xlu0 %512
    %514 = vrot.lane.b32.xlu0 %v494, 64
    %v515 = vpop.permute.xlu0 %514
    %516 = vrot.lane.b32.xlu0 %v495, 64
    %v517 = vpop.permute.xlu0 %516
    %518 = vrot.lane.b32.xlu0 %v496, 64
    %v519 = vpop.permute.xlu0 %518
    %520 = vrot.lane.b32.xlu0 %v497, 64
    %v521 = vpop.permute.xlu0 %520
    %v531 = vsel %vm94, %v464, 0
    %v534 = vsel %vm94, %v465, 0
    %536 = vmatprep.subr.mxu0 0.0
    %537 = vmatpush1.msra.mxu0 0.0
    %538 = vmatprep.subr.mxu0 0.0
    %539 = vmatpush1.msra.mxu0 0.0
    %540 = vmatprep.subr.mxu0 0.0
    %541 = vmatpush1.msra.mxu0 0.0
    %542 = vmatprep.subr.mxu0 0.0
    %543 = vmatpush1.msra.mxu0 0.0
    %544 = vmatprep.subr.mxu0 0.0
    %545 = vmatpush1.msra.mxu0 0.0
    %546 = vmatprep.subr.mxu0 0.0
    %547 = vmatpush1.msra.mxu0 0.0
    %548 = vmatprep.subr.mxu0 0.0
    %549 = vmatpush1.msra.mxu0 0.0
    %550 = vmatprep.subr.mxu0 0.0
    %551 = vmatpush1.msra.mxu0 0.0
    %552 = vmatprep.subr.mxu0 0.0
    %553 = vmatpush1.msra.mxu0 %v521
    %554 = vmatprep.subr.mxu0 0.0
    %555 = vmatpush1.msra.mxu0 %v519
    %556 = vmatprep.subr.mxu0 0.0
    %557 = vmatpush1.msra.mxu0 %v517
    %558 = vmatprep.subr.mxu0 0.0
    %559 = vmatpush1.msra.mxu0 %v515
    %560 = vmatprep.subr.mxu0 0.0
    %561 = vmatpush1.msra.mxu0 %v513
    %562 = vmatprep.subr.mxu0 0.0
    %563 = vmatpush1.msra.mxu0 %v511
    %564 = vmatprep.subr.mxu0 0.0
    %565 = vmatpush1.msra.mxu0 %v509
    %566 = vmatprep.subr.mxu0 0.0
    %567 = vmatpush1.msra.mxu0 %v507
    %568 = vmatprep.subr.mxu0 0.0
    %569 = vmatpush2.msra.mxu0 0.0
    %570 = vmatprep.subr.mxu0 0.0
    %571 = vmatpush2.msra.mxu0 0.0
    %572 = vmatprep.subr.mxu0 0.0
    %573 = vmatpush2.msra.mxu0 0.0
    %574 = vmatprep.subr.mxu0 0.0
    %575 = vmatpush2.msra.mxu0 0.0
    %576 = vmatprep.subr.mxu0 0.0
    %577 = vmatpush2.msra.mxu0 0.0
    %578 = vmatprep.subr.mxu0 0.0
    %579 = vmatpush2.msra.mxu0 0.0
    %580 = vmatprep.subr.mxu0 0.0
    %581 = vmatpush2.msra.mxu0 0.0
    %582 = vmatprep.subr.mxu0 0.0
    %583 = vmatpush2.msra.mxu0 0.0
    %584 = vmatprep.subr.mxu0 0.0
    %585 = vmatpush2.msra.mxu0 0.0
    %586 = vmatprep.subr.mxu0 0.0
    %587 = vmatpush2.msra.mxu0 0.0
    %588 = vmatprep.subr.mxu0 0.0
    %589 = vmatpush2.msra.mxu0 0.0
    %590 = vmatprep.subr.mxu0 0.0
    %591 = vmatpush2.msra.mxu0 0.0
    %592 = vmatprep.subr.mxu0 0.0
    %593 = vmatpush2.msra.mxu0 0.0
    %594 = vmatprep.subr.mxu0 0.0
    %595 = vmatpush2.msra.mxu0 0.0
    %596 = vmatprep.subr.mxu0 0.0
    %597 = vmatpush2.msra.mxu0 0.0
    %598 = vmatprep.subr.mxu0 0.0
    %599 = vmatpush2.msra.mxu0 0.0
    %600 = vmatprep.mubr.f32.mxu0 0.0
    %601 = vmatmul.mubr.f32.gmra.mxu0 %v531
    %v602 = vpop.f32.mrf.mxu0
    %v603 = vadd.f32 0.0, %v602
    %v604 = vpop.f32.mrf.mxu0
    %605 = vmatprep.mubr.f32.mxu0 0.0
    %606 = vmatmul.mubr.f32.gmra.mxu0 %v534
    %v607 = vpop.f32.mrf.mxu0
    %v608 = vadd.f32 0.0, %v607
    %v609 = vpop.f32.mrf.mxu0
    %610 = vdwg.mxu0
    %v611 = vmul.f32 %v603, %v603
    %v612 = vmul.f32 %v608, %v608
    %v613 = vsel %vm186, %v611, 0.0
    %614 = vadd.xlane.f32.xlu0 %v613
    %v615 = vpop.xlane.xlu0 %614
    %v616 = vsel %vm186, %v612, 0.0
    %617 = vadd.xlane.f32.xlu0 %v616
    %v618 = vpop.xlane.xlu0 %617
    %v619 = vmul.f32 %v615, %v193
    %v620 = vmul.f32 %v618, %v193
    %v621 = vadd.f32 %v619, 1e-06
    %v622 = vadd.f32 %v620, 1e-06
    %v623 = vrsqrt.pop %v621
    %v624 = vrsqrt.pop %v622
    %v625 = vmul.f32 %v603, %v623
    %v626 = vmul.f32 %v608, %v624
    %629 = vrot.lane.b32.xlu0 %v279, 32
    %v630 = vpop.permute.xlu0 %629
    %631 = vrot.lane.b32.xlu0 %v284, 32
    %v632 = vpop.permute.xlu0 %631
    %v635 = vmul.f32 %v625, %v630
    %v636 = vmul.f32 %v626, %v632
    %v637 = vld [vmem:[%s3] sm:$0xff]
    %v638 = vld [vmem:[%s3 + $0x8] sm:$0xff]
    %v639 = vld [vmem:[%s3 + $0x10] sm:$0xff]
    %v640 = vld [vmem:[%s3 + $0x18] sm:$0xff]
    %v642 = vsel %vm186, %v635, 0
    %v645 = vsel %vm186, %v636, 0
    %647 = vmatprep.subr.mxu0 0.0
    %648 = vmatpush1.msra.mxu0 0.0
    %649 = vmatprep.subr.mxu0 0.0
    %650 = vmatpush1.msra.mxu0 0.0
    %651 = vmatprep.subr.mxu0 0.0
    %652 = vmatpush1.msra.mxu0 0.0
    %653 = vmatprep.subr.mxu0 0.0
    %654 = vmatpush1.msra.mxu0 0.0
    %655 = vmatprep.subr.mxu0 0.0
    %656 = vmatpush1.msra.mxu0 0.0
    %657 = vmatprep.subr.mxu0 0.0
    %658 = vmatpush1.msra.mxu0 0.0
    %659 = vmatprep.subr.mxu0 0.0
    %660 = vmatpush1.msra.mxu0 0.0
    %661 = vmatprep.subr.mxu0 0.0
    %662 = vmatpush1.msra.mxu0 0.0
    %663 = vmatprep.subr.mxu0 0.0
    %664 = vmatpush1.msra.mxu0 0.0
    %665 = vmatprep.subr.mxu0 0.0
    %666 = vmatpush1.msra.mxu0 0.0
    %667 = vmatprep.subr.mxu0 0.0
    %668 = vmatpush1.msra.mxu0 0.0
    %669 = vmatprep.subr.mxu0 0.0
    %670 = vmatpush1.msra.mxu0 0.0
    %671 = vmatprep.subr.mxu0 0.0
    %672 = vmatpush1.msra.mxu0 %v640
    %673 = vmatprep.subr.mxu0 0.0
    %674 = vmatpush1.msra.mxu0 %v639
    %675 = vmatprep.subr.mxu0 0.0
    %676 = vmatpush1.msra.mxu0 %v638
    %677 = vmatprep.subr.mxu0 0.0
    %678 = vmatpush1.msra.mxu0 %v637
    %679 = vmatprep.subr.mxu0 0.0
    %680 = vmatpush2.msra.mxu0 0.0
    %681 = vmatprep.subr.mxu0 0.0
    %682 = vmatpush2.msra.mxu0 0.0
    %683 = vmatprep.subr.mxu0 0.0
    %684 = vmatpush2.msra.mxu0 0.0
    %685 = vmatprep.subr.mxu0 0.0
    %686 = vmatpush2.msra.mxu0 0.0
    %687 = vmatprep.subr.mxu0 0.0
    %688 = vmatpush2.msra.mxu0 0.0
    %689 = vmatprep.subr.mxu0 0.0
    %690 = vmatpush2.msra.mxu0 0.0
    %691 = vmatprep.subr.mxu0 0.0
    %692 = vmatpush2.msra.mxu0 0.0
    %693 = vmatprep.subr.mxu0 0.0
    %694 = vmatpush2.msra.mxu0 0.0
    %695 = vmatprep.subr.mxu0 0.0
    %696 = vmatpush2.msra.mxu0 0.0
    %697 = vmatprep.subr.mxu0 0.0
    %698 = vmatpush2.msra.mxu0 0.0
    %699 = vmatprep.subr.mxu0 0.0
    %700 = vmatpush2.msra.mxu0 0.0
    %701 = vmatprep.subr.mxu0 0.0
    %702 = vmatpush2.msra.mxu0 0.0
    %703 = vmatprep.subr.mxu0 0.0
    %704 = vmatpush2.msra.mxu0 0.0
    %705 = vmatprep.subr.mxu0 0.0
    %706 = vmatpush2.msra.mxu0 0.0
    %707 = vmatprep.subr.mxu0 0.0
    %708 = vmatpush2.msra.mxu0 0.0
    %709 = vmatprep.subr.mxu0 0.0
    %710 = vmatpush2.msra.mxu0 0.0
    %711 = vmatprep.mubr.f32.mxu0 0.0
    %712 = vmatmul.mubr.f32.gmra.mxu0 %v642
    %v713 = vpop.f32.mrf.mxu0
    %v714 = vadd.f32 0.0, %v713
    %v715 = vpop.f32.mrf.mxu0
    %716 = vmatprep.mubr.f32.mxu0 0.0
    %717 = vmatmul.mubr.f32.gmra.mxu0 %v645
    %v718 = vpop.f32.mrf.mxu0
    %v719 = vadd.f32 0.0, %v718
    %v720 = vpop.f32.mrf.mxu0
    %721 = vdwg.mxu0
    %v722 = vadd.f32 %v168, %v714
    %v723 = vadd.f32 %v173, %v719
    %v724 = vmul.f32 %v722, %v722
    %v725 = vmul.f32 %v723, %v723
    %v726 = vsel %vm186, %v724, 0.0
    %727 = vadd.xlane.f32.xlu0 %v726
    %v728 = vpop.xlane.xlu0 %727
    %v729 = vsel %vm186, %v725, 0.0
    %730 = vadd.xlane.f32.xlu0 %v729
    %v731 = vpop.xlane.xlu0 %730
    %v732 = vmul.f32 %v728, %v193
    %v733 = vmul.f32 %v731, %v193
    %v734 = vadd.f32 %v732, 1e-06
    %v735 = vadd.f32 %v733, 1e-06
    %v736 = vrsqrt.pop %v734
    %v737 = vrsqrt.pop %v735
    %v738 = vmul.f32 %v722, %v736
    %v739 = vmul.f32 %v723, %v737
    %v740 = vld [vmem:[%s4] sm:$0xff]
    %v741 = vld [vmem:[%s4 + $0x8] sm:$0xff]
    %v742 = vld [vmem:[%s4 + $0x10] sm:$0xff]
    %v743 = vld [vmem:[%s4 + $0x18] sm:$0xff]
    %v745 = vsel %vm186, %v738, 0
    %v748 = vsel %vm186, %v739, 0
    %750 = vmatprep.subr.mxu0 0.0
    %751 = vmatpush1.msra.mxu0 0.0
    %752 = vmatprep.subr.mxu0 0.0
    %753 = vmatpush1.msra.mxu0 0.0
    %754 = vmatprep.subr.mxu0 0.0
    %755 = vmatpush1.msra.mxu0 0.0
    %756 = vmatprep.subr.mxu0 0.0
    %757 = vmatpush1.msra.mxu0 0.0
    %758 = vmatprep.subr.mxu0 0.0
    %759 = vmatpush1.msra.mxu0 0.0
    %760 = vmatprep.subr.mxu0 0.0
    %761 = vmatpush1.msra.mxu0 0.0
    %762 = vmatprep.subr.mxu0 0.0
    %763 = vmatpush1.msra.mxu0 0.0
    %764 = vmatprep.subr.mxu0 0.0
    %765 = vmatpush1.msra.mxu0 0.0
    %766 = vmatprep.subr.mxu0 0.0
    %767 = vmatpush1.msra.mxu0 0.0
    %768 = vmatprep.subr.mxu0 0.0
    %769 = vmatpush1.msra.mxu0 0.0
    %770 = vmatprep.subr.mxu0 0.0
    %771 = vmatpush1.msra.mxu0 0.0
    %772 = vmatprep.subr.mxu0 0.0
    %773 = vmatpush1.msra.mxu0 0.0
    %774 = vmatprep.subr.mxu0 0.0
    %775 = vmatpush1.msra.mxu0 %v743
    %776 = vmatprep.subr.mxu0 0.0
    %777 = vmatpush1.msra.mxu0 %v742
    %778 = vmatprep.subr.mxu0 0.0
    %779 = vmatpush1.msra.mxu0 %v741
    %780 = vmatprep.subr.mxu0 0.0
    %781 = vmatpush1.msra.mxu0 %v740
    %782 = vmatprep.subr.mxu0 0.0
    %783 = vmatpush2.msra.mxu0 0.0
    %784 = vmatprep.subr.mxu0 0.0
    %785 = vmatpush2.msra.mxu0 0.0
    %786 = vmatprep.subr.mxu0 0.0
    %787 = vmatpush2.msra.mxu0 0.0
    %788 = vmatprep.subr.mxu0 0.0
    %789 = vmatpush2.msra.mxu0 0.0
    %790 = vmatprep.subr.mxu0 0.0
    %791 = vmatpush2.msra.mxu0 0.0
    %792 = vmatprep.subr.mxu0 0.0
    %793 = vmatpush2.msra.mxu0 0.0
    %794 = vmatprep.subr.mxu0 0.0
    %795 = vmatpush2.msra.mxu0 0.0
    %796 = vmatprep.subr.mxu0 0.0
    %797 = vmatpush2.msra.mxu0 0.0
    %798 = vmatprep.subr.mxu0 0.0
    %799 = vmatpush2.msra.mxu0 0.0
    %800 = vmatprep.subr.mxu0 0.0
    %801 = vmatpush2.msra.mxu0 0.0
    %802 = vmatprep.subr.mxu0 0.0
    %803 = vmatpush2.msra.mxu0 0.0
    %804 = vmatprep.subr.mxu0 0.0
    %805 = vmatpush2.msra.mxu0 0.0
    %806 = vmatprep.subr.mxu0 0.0
    %807 = vmatpush2.msra.mxu0 0.0
    %808 = vmatprep.subr.mxu0 0.0
    %809 = vmatpush2.msra.mxu0 0.0
    %810 = vmatprep.subr.mxu0 0.0
    %811 = vmatpush2.msra.mxu0 0.0
    %812 = vmatprep.subr.mxu0 0.0
    %813 = vmatpush2.msra.mxu0 0.0
    %814 = vmatprep.mubr.f32.mxu0 0.0
    %815 = vmatmul.mubr.f32.gmra.mxu0 %v745
    %v816 = vpop.f32.mrf.mxu0
    %v817 = vadd.f32 0.0, %v816
    %v818 = vpop.f32.mrf.mxu0
    %819 = vmatprep.mubr.f32.mxu0 0.0
    %820 = vmatmul.mubr.f32.gmra.mxu0 %v748
    %v821 = vpop.f32.mrf.mxu0
    %v822 = vadd.f32 0.0, %v821
    %v823 = vpop.f32.mrf.mxu0
    %824 = vdwg.mxu0
    %827 = vrot.lane.b32.xlu0 %v817, 64
    %v828 = vpop.permute.xlu0 %827
    %829 = vrot.lane.b32.xlu0 %v822, 64
    %v830 = vpop.permute.xlu0 %829
    %v833 = vmul.f32 %v817, %v828
    %v834 = vmul.f32 %v822, %v830
    %v835 = vld [vmem:[%s5] sm:$0xff]
    %v836 = vld [vmem:[%s5 + $0x8] sm:$0xff]
    %v837 = vld [vmem:[%s5 + $0x10] sm:$0xff]
    %v838 = vld [vmem:[%s5 + $0x18] sm:$0xff]
    %v839 = vld [vmem:[%s5 + $0x20] sm:$0xff]
    %v840 = vld [vmem:[%s5 + $0x28] sm:$0xff]
    %v841 = vld [vmem:[%s5 + $0x30] sm:$0xff]
    %v842 = vld [vmem:[%s5 + $0x38] sm:$0xff]
    %v844 = vsel %vm94, %v833, 0
    %v847 = vsel %vm94, %v834, 0
    %849 = vmatprep.subr.mxu0 0.0
    %850 = vmatpush1.msra.mxu0 0.0
    %851 = vmatprep.subr.mxu0 0.0
    %852 = vmatpush1.msra.mxu0 0.0
    %853 = vmatprep.subr.mxu0 0.0
    %854 = vmatpush1.msra.mxu0 0.0
    %855 = vmatprep.subr.mxu0 0.0
    %856 = vmatpush1.msra.mxu0 0.0
    %857 = vmatprep.subr.mxu0 0.0
    %858 = vmatpush1.msra.mxu0 0.0
    %859 = vmatprep.subr.mxu0 0.0
    %860 = vmatpush1.msra.mxu0 0.0
    %861 = vmatprep.subr.mxu0 0.0
    %862 = vmatpush1.msra.mxu0 0.0
    %863 = vmatprep.subr.mxu0 0.0
    %864 = vmatpush1.msra.mxu0 0.0
    %865 = vmatprep.subr.mxu0 0.0
    %866 = vmatpush1.msra.mxu0 %v842
    %867 = vmatprep.subr.mxu0 0.0
    %868 = vmatpush1.msra.mxu0 %v841
    %869 = vmatprep.subr.mxu0 0.0
    %870 = vmatpush1.msra.mxu0 %v840
    %871 = vmatprep.subr.mxu0 0.0
    %872 = vmatpush1.msra.mxu0 %v839
    %873 = vmatprep.subr.mxu0 0.0
    %874 = vmatpush1.msra.mxu0 %v838
    %875 = vmatprep.subr.mxu0 0.0
    %876 = vmatpush1.msra.mxu0 %v837
    %877 = vmatprep.subr.mxu0 0.0
    %878 = vmatpush1.msra.mxu0 %v836
    %879 = vmatprep.subr.mxu0 0.0
    %880 = vmatpush1.msra.mxu0 %v835
    %881 = vmatprep.subr.mxu0 0.0
    %882 = vmatpush2.msra.mxu0 0.0
    %883 = vmatprep.subr.mxu0 0.0
    %884 = vmatpush2.msra.mxu0 0.0
    %885 = vmatprep.subr.mxu0 0.0
    %886 = vmatpush2.msra.mxu0 0.0
    %887 = vmatprep.subr.mxu0 0.0
    %888 = vmatpush2.msra.mxu0 0.0
    %889 = vmatprep.subr.mxu0 0.0
    %890 = vmatpush2.msra.mxu0 0.0
    %891 = vmatprep.subr.mxu0 0.0
    %892 = vmatpush2.msra.mxu0 0.0
    %893 = vmatprep.subr.mxu0 0.0
    %894 = vmatpush2.msra.mxu0 0.0
    %895 = vmatprep.subr.mxu0 0.0
    %896 = vmatpush2.msra.mxu0 0.0
    %897 = vmatprep.subr.mxu0 0.0
    %898 = vmatpush2.msra.mxu0 0.0
    %899 = vmatprep.subr.mxu0 0.0
    %900 = vmatpush2.msra.mxu0 0.0
    %901 = vmatprep.subr.mxu0 0.0
    %902 = vmatpush2.msra.mxu0 0.0
    %903 = vmatprep.subr.mxu0 0.0
    %904 = vmatpush2.msra.mxu0 0.0
    %905 = vmatprep.subr.mxu0 0.0
    %906 = vmatpush2.msra.mxu0 0.0
    %907 = vmatprep.subr.mxu0 0.0
    %908 = vmatpush2.msra.mxu0 0.0
    %909 = vmatprep.subr.mxu0 0.0
    %910 = vmatpush2.msra.mxu0 0.0
    %911 = vmatprep.subr.mxu0 0.0
    %912 = vmatpush2.msra.mxu0 0.0
    %913 = vmatprep.mubr.f32.mxu0 0.0
    %914 = vmatmul.mubr.f32.gmra.mxu0 %v844
    %v915 = vpop.f32.mrf.mxu0
    %v916 = vadd.f32 0.0, %v915
    %v917 = vpop.f32.mrf.mxu0
    %918 = vmatprep.mubr.f32.mxu0 0.0
    %919 = vmatmul.mubr.f32.gmra.mxu0 %v847
    %v920 = vpop.f32.mrf.mxu0
    %v921 = vadd.f32 0.0, %v920
    %v922 = vpop.f32.mrf.mxu0
    %923 = vdwg.mxu0
    %v924 = vadd.f32 %v722, %v916
    %v925 = vadd.f32 %v723, %v921
    %v926 = vmul.f32 %v924, %v924
    %v927 = vmul.f32 %v925, %v925
    %v928 = vsel %vm186, %v926, 0.0
    %929 = vadd.xlane.f32.xlu0 %v928
    %v930 = vpop.xlane.xlu0 %929
    %v931 = vsel %vm186, %v927, 0.0
    %932 = vadd.xlane.f32.xlu0 %v931
    %v933 = vpop.xlane.xlu0 %932
    %v934 = vmul.f32 %v930, %v193
    %v935 = vmul.f32 %v933, %v193
    %v936 = vadd.f32 %v934, 1e-06
    %v937 = vadd.f32 %v935, 1e-06
    %v938 = vrsqrt.pop %v936
    %v939 = vrsqrt.pop %v937
    %v940 = vmul.f32 %v924, %v938
    %v941 = vmul.f32 %v925, %v939
    %s942 = scalar_lea.vmem %s2, 32
    %v943 = vld [vmem:[%s942] sm:$0xff]
    %v944 = vld [vmem:[%s942 + $0x8] sm:$0xff]
    %v945 = vld [vmem:[%s942 + $0x10] sm:$0xff]
    %v946 = vld [vmem:[%s942 + $0x18] sm:$0xff]
    %v948 = vsel %vm186, %v940, 0
    %v951 = vsel %vm186, %v941, 0
    %953 = vmatprep.subr.mxu0 0.0
    %954 = vmatpush1.msra.mxu0 0.0
    %955 = vmatprep.subr.mxu0 0.0
    %956 = vmatpush1.msra.mxu0 0.0
    %957 = vmatprep.subr.mxu0 0.0
    %958 = vmatpush1.msra.mxu0 0.0
    %959 = vmatprep.subr.mxu0 0.0
    %960 = vmatpush1.msra.mxu0 0.0
    %961 = vmatprep.subr.mxu0 0.0
    %962 = vmatpush1.msra.mxu0 0.0
    %963 = vmatprep.subr.mxu0 0.0
    %964 = vmatpush1.msra.mxu0 0.0
    %965 = vmatprep.subr.mxu0 0.0
    %966 = vmatpush1.msra.mxu0 0.0
    %967 = vmatprep.subr.mxu0 0.0
    %968 = vmatpush1.msra.mxu0 0.0
    %969 = vmatprep.subr.mxu0 0.0
    %970 = vmatpush1.msra.mxu0 0.0
    %971 = vmatprep.subr.mxu0 0.0
    %972 = vmatpush1.msra.mxu0 0.0
    %973 = vmatprep.subr.mxu0 0.0
    %974 = vmatpush1.msra.mxu0 0.0
    %975 = vmatprep.subr.mxu0 0.0
    %976 = vmatpush1.msra.mxu0 0.0
    %977 = vmatprep.subr.mxu0 0.0
    %978 = vmatpush1.msra.mxu0 %v946
    %979 = vmatprep.subr.mxu0 0.0
    %980 = vmatpush1.msra.mxu0 %v945
    %981 = vmatprep.subr.mxu0 0.0
    %982 = vmatpush1.msra.mxu0 %v944
    %983 = vmatprep.subr.mxu0 0.0
    %984 = vmatpush1.msra.mxu0 %v943
    %985 = vmatprep.subr.mxu0 0.0
    %986 = vmatpush2.msra.mxu0 0.0
    %987 = vmatprep.subr.mxu0 0.0
    %988 = vmatpush2.msra.mxu0 0.0
    %989 = vmatprep.subr.mxu0 0.0
    %990 = vmatpush2.msra.mxu0 0.0
    %991 = vmatprep.subr.mxu0 0.0
    %992 = vmatpush2.msra.mxu0 0.0
    %993 = vmatprep.subr.mxu0 0.0
    %994 = vmatpush2.msra.mxu0 0.0
    %995 = vmatprep.subr.mxu0 0.0
    %996 = vmatpush2.msra.mxu0 0.0
    %997 = vmatprep.subr.mxu0 0.0
    %998 = vmatpush2.msra.mxu0 0.0
    %999 = vmatprep.subr.mxu0 0.0
    %1000 = vmatpush2.msra.mxu0 0.0
    %1001 = vmatprep.subr.mxu0 0.0
    %1002 = vmatpush2.msra.mxu0 0.0
    %1003 = vmatprep.subr.mxu0 0.0
    %1004 = vmatpush2.msra.mxu0 0.0
    %1005 = vmatprep.subr.mxu0 0.0
    %1006 = vmatpush2.msra.mxu0 0.0
    %1007 = vmatprep.subr.mxu0 0.0
    %1008 = vmatpush2.msra.mxu0 0.0
    %1009 = vmatprep.subr.mxu0 0.0
    %1010 = vmatpush2.msra.mxu0 0.0
    %1011 = vmatprep.subr.mxu0 0.0
    %1012 = vmatpush2.msra.mxu0 0.0
    %1013 = vmatprep.subr.mxu0 0.0
    %1014 = vmatpush2.msra.mxu0 0.0
    %1015 = vmatprep.subr.mxu0 0.0
    %1016 = vmatpush2.msra.mxu0 0.0
    %1017 = vmatprep.mubr.f32.mxu0 0.0
    %1018 = vmatmul.mubr.f32.gmra.mxu0 %v948
    %v1019 = vpop.f32.mrf.mxu0
    %v1020 = vadd.f32 0.0, %v1019
    %v1021 = vpop.f32.mrf.mxu0
    %1022 = vmatprep.mubr.f32.mxu0 0.0
    %1023 = vmatmul.mubr.f32.gmra.mxu0 %v951
    %v1024 = vpop.f32.mrf.mxu0
    %v1025 = vadd.f32 0.0, %v1024
    %v1026 = vpop.f32.mrf.mxu0
    %1027 = vdwg.mxu0
    %v1028 = vxor.u32 %v1020, 2147483648
    %v1029 = vxor.u32 %v1025, 2147483648
    %v1030 = vmul.f32 %v1028, 1.442695
    %v1031 = vpow.pop %v1030
    %v1032 = vmul.f32 %v1029, 1.442695
    %v1033 = vpow.pop %v1032
    %v1034 = vadd.f32 %v1031, 1.0
    %v1035 = vadd.f32 %v1033, 1.0
    %v1036 = vrcp.pop %v1034
    %v1037 = vmul.f32 1.0, %v1036
    %v1038 = vrcp.pop %v1035
    %v1039 = vmul.f32 1.0, %v1038
    %v1040 = vmul.f32 %v1020, %v1037
    %v1041 = vmul.f32 %v1025, %v1039
    %v1042 = vld [vmem:[#allocation2] sm:$0xff]
    %v1043 = vld [vmem:[#allocation2 + $0x8] sm:$0xff]
    %v1044 = vld [vmem:[#allocation5] sm:$0xff]
    %v1045 = vld [vmem:[#allocation5 + $0x8] sm:$0xff]
    %v1046 = vmul.f32 %v1040, %v1042
    %v1047 = vmul.f32 %v1041, %v1043
    %v1048 = vmul.f32 %v1040, %v1044
    %v1049 = vmul.f32 %v1041, %v1045
    %1052 = vrot.lane.b32.xlu0 %v1048, 32
    %v1053 = vpop.permute.xlu0 %1052
    %1054 = vrot.lane.b32.xlu0 %v1049, 32
    %v1055 = vpop.permute.xlu0 %1054
    %v1058 = vsel %vm186, %v1046, %v1053
    %v1059 = vsel %vm186, %v1047, %v1055
    %1062 = vrot.lane.b32.xlu0 %v1042, 32
    %v1063 = vpop.permute.xlu0 %1062
    %1064 = vrot.lane.b32.xlu0 %v1043, 32
    %v1065 = vpop.permute.xlu0 %1064
    %v1068 = vmul.f32 %v1040, %v1063
    %v1069 = vmul.f32 %v1041, %v1065
    %1072 = vrot.lane.b32.xlu0 %v1044, 32
    %v1073 = vpop.permute.xlu0 %1072
    %1074 = vrot.lane.b32.xlu0 %v1045, 32
    %v1075 = vpop.permute.xlu0 %1074
    %v1078 = vmul.f32 %v1040, %v1073
    %v1079 = vmul.f32 %v1041, %v1075
    %1082 = vrot.lane.b32.xlu0 %v1068, 96
    %v1083 = vpop.permute.xlu0 %1082
    %1084 = vrot.lane.b32.xlu0 %v1069, 96
    %v1085 = vpop.permute.xlu0 %1084
    %v1088 = vsel %vm186, %v1083, %v1078
    %v1089 = vsel %vm186, %v1085, %v1079
    %v1090 = vld [vmem:[%s10] sm:$0xff]
    %v1091 = vld [vmem:[%s10 + $0x8] sm:$0xff]
    %v1092 = vld [vmem:[%s10 + $0x10] sm:$0xff]
    %v1093 = vld [vmem:[%s10 + $0x18] sm:$0xff]
    %v1094 = vld [vmem:[%s10 + $0x20] sm:$0xff]
    %v1095 = vld [vmem:[%s10 + $0x28] sm:$0xff]
    %v1096 = vld [vmem:[%s10 + $0x30] sm:$0xff]
    %v1097 = vld [vmem:[%s10 + $0x38] sm:$0xff]
    %v1098 = vmul.f32 %v1088, %v1090
    %v1099 = vmul.f32 %v1088, %v1091
    %v1100 = vmul.f32 %v1088, %v1092
    %v1101 = vmul.f32 %v1088, %v1093
    %v1102 = vmul.f32 %v1089, %v1094
    %v1103 = vmul.f32 %v1089, %v1095
    %v1104 = vmul.f32 %v1089, %v1096
    %v1105 = vmul.f32 %v1089, %v1097
    %v1107 = vsel %vm94, %v1058, 0
    %v1110 = vsel %vm94, %v1059, 0
    %v1113 = vsel %vm94, %v1098, 0
    %v1116 = vsel %vm94, %v1099, 0
    %v1119 = vsel %vm94, %v1100, 0
    %v1122 = vsel %vm94, %v1101, 0
    %v1125 = vsel %vm94, %v1102, 0
    %v1128 = vsel %vm94, %v1103, 0
    %v1131 = vsel %vm94, %v1104, 0
    %v1134 = vsel %vm94, %v1105, 0
    %1136 = vmatprep.subr.mxu0 0.0
    %1137 = vmatpush1.xpose.msra.mxu0 0.0
    %1138 = vmatprep.subr.mxu0 0.0
    %1139 = vmatpush1.xpose.msra.mxu0 0.0
    %1140 = vmatprep.subr.mxu0 0.0
    %1141 = vmatpush1.xpose.msra.mxu0 0.0
    %1142 = vmatprep.subr.mxu0 0.0
    %1143 = vmatpush1.xpose.msra.mxu0 0.0
    %1144 = vmatprep.subr.mxu0 0.0
    %1145 = vmatpush1.xpose.msra.mxu0 0.0
    %1146 = vmatprep.subr.mxu0 0.0
    %1147 = vmatpush1.xpose.msra.mxu0 0.0
    %1148 = vmatprep.subr.mxu0 0.0
    %1149 = vmatpush1.xpose.msra.mxu0 0.0
    %1150 = vmatprep.subr.mxu0 0.0
    %1151 = vmatpush1.xpose.msra.mxu0 0.0
    %1152 = vmatprep.subr.mxu0 0.0
    %1153 = vmatpush1.xpose.msra.mxu0 %v1134
    %1154 = vmatprep.subr.mxu0 0.0
    %1155 = vmatpush1.xpose.msra.mxu0 %v1131
    %1156 = vmatprep.subr.mxu0 0.0
    %1157 = vmatpush1.xpose.msra.mxu0 %v1128
    %1158 = vmatprep.subr.mxu0 0.0
    %1159 = vmatpush1.xpose.msra.mxu0 %v1125
    %1160 = vmatprep.subr.mxu0 0.0
    %1161 = vmatpush1.xpose.msra.mxu0 %v1122
    %1162 = vmatprep.subr.mxu0 0.0
    %1163 = vmatpush1.xpose.msra.mxu0 %v1119
    %1164 = vmatprep.subr.mxu0 0.0
    %1165 = vmatpush1.xpose.msra.mxu0 %v1116
    %1166 = vmatprep.subr.mxu0 0.0
    %1167 = vmatpush1.xpose.msra.mxu0 %v1113
    %1168 = vmatprep.subr.mxu0 0.0
    %1169 = vmatpush2.xpose.msra.mxu0 0.0
    %1170 = vmatprep.subr.mxu0 0.0
    %1171 = vmatpush2.xpose.msra.mxu0 0.0
    %1172 = vmatprep.subr.mxu0 0.0
    %1173 = vmatpush2.xpose.msra.mxu0 0.0
    %1174 = vmatprep.subr.mxu0 0.0
    %1175 = vmatpush2.xpose.msra.mxu0 0.0
    %1176 = vmatprep.subr.mxu0 0.0
    %1177 = vmatpush2.xpose.msra.mxu0 0.0
    %1178 = vmatprep.subr.mxu0 0.0
    %1179 = vmatpush2.xpose.msra.mxu0 0.0
    %1180 = vmatprep.subr.mxu0 0.0
    %1181 = vmatpush2.xpose.msra.mxu0 0.0
    %1182 = vmatprep.subr.mxu0 0.0
    %1183 = vmatpush2.xpose.msra.mxu0 0.0
    %1184 = vmatprep.subr.mxu0 0.0
    %1185 = vmatpush2.xpose.msra.mxu0 0.0
    %1186 = vmatprep.subr.mxu0 0.0
    %1187 = vmatpush2.xpose.msra.mxu0 0.0
    %1188 = vmatprep.subr.mxu0 0.0
    %1189 = vmatpush2.xpose.msra.mxu0 0.0
    %1190 = vmatprep.subr.mxu0 0.0
    %1191 = vmatpush2.xpose.msra.mxu0 0.0
    %1192 = vmatprep.subr.mxu0 0.0
    %1193 = vmatpush2.xpose.msra.mxu0 0.0
    %1194 = vmatprep.subr.mxu0 0.0
    %1195 = vmatpush2.xpose.msra.mxu0 0.0
    %1196 = vmatprep.subr.mxu0 0.0
    %1197 = vmatpush2.xpose.msra.mxu0 0.0
    %1198 = vmatprep.subr.mxu0 0.0
    %1199 = vmatpush2.xpose.msra.mxu0 0.0
    %1200 = vmatprep.mubr.f32.mxu0 0.0
    %1201 = vmatmul.mubr.f32.gmra.mxu0 %v1107
    %v1202 = vpop.f32.mrf.mxu0
    %v1203 = vadd.f32 0.0, %v1202
    %v1204 = vpop.f32.mrf.mxu0
    %1205 = vmatprep.mubr.f32.mxu0 0.0
    %1206 = vmatmul.mubr.f32.gmra.mxu0 %v1110
    %v1207 = vpop.f32.mrf.mxu0
    %v1208 = vadd.f32 0.0, %v1207
    %v1209 = vpop.f32.mrf.mxu0
    %1210 = vdwg.mxu0
    %s1211 = scalar_lea.vmem %s6, 16
    %v1212 = vld [vmem:[%s1211] sm:$0xff]
    %v1213 = vld [vmem:[%s1211 + $0x8] sm:$0xff]
    %v1214 = vmul.f32 %v1203, %v1212
    %v1215 = vmul.f32 %v1208, %v1213
    %v1216 = vmul.f32 %v1020, %v467
    %v1217 = vmul.f32 %v1020, %v469
    %v1218 = vmul.f32 %v1020, %v471
    %v1219 = vmul.f32 %v1020, %v473
    %v1220 = vmul.f32 %v1025, %v475
    %v1221 = vmul.f32 %v1025, %v477
    %v1222 = vmul.f32 %v1025, %v479
    %v1223 = vmul.f32 %v1025, %v481
    %1232 = vrot.lane.b32.xlu0 %v1216, 64
    %v1233 = vpop.permute.xlu0 %1232
    %1234 = vrot.lane.b32.xlu0 %v1217, 64
    %v1235 = vpop.permute.xlu0 %1234
    %1236 = vrot.lane.b32.xlu0 %v1218, 64
    %v1237 = vpop.permute.xlu0 %1236
    %1238 = vrot.lane.b32.xlu0 %v1219, 64
    %v1239 = vpop.permute.xlu0 %1238
    %1240 = vrot.lane.b32.xlu0 %v1220, 64
    %v1241 = vpop.permute.xlu0 %1240
    %1242 = vrot.lane.b32.xlu0 %v1221, 64
    %v1243 = vpop.permute.xlu0 %1242
    %1244 = vrot.lane.b32.xlu0 %v1222, 64
    %v1245 = vpop.permute.xlu0 %1244
    %1246 = vrot.lane.b32.xlu0 %v1223, 64
    %v1247 = vpop.permute.xlu0 %1246
    %v1257 = vsel %vm94, %v1214, 0
    %v1260 = vsel %vm94, %v1215, 0
    %1262 = vmatprep.subr.mxu0 0.0
    %1263 = vmatpush1.msra.mxu0 0.0
    %1264 = vmatprep.subr.mxu0 0.0
    %1265 = vmatpush1.msra.mxu0 0.0
    %1266 = vmatprep.subr.mxu0 0.0
    %1267 = vmatpush1.msra.mxu0 0.0
    %1268 = vmatprep.subr.mxu0 0.0
    %1269 = vmatpush1.msra.mxu0 0.0
    %1270 = vmatprep.subr.mxu0 0.0
    %1271 = vmatpush1.msra.mxu0 0.0
    %1272 = vmatprep.subr.mxu0 0.0
    %1273 = vmatpush1.msra.mxu0 0.0
    %1274 = vmatprep.subr.mxu0 0.0
    %1275 = vmatpush1.msra.mxu0 0.0
    %1276 = vmatprep.subr.mxu0 0.0
    %1277 = vmatpush1.msra.mxu0 0.0
    %1278 = vmatprep.subr.mxu0 0.0
    %1279 = vmatpush1.msra.mxu0 %v1247
    %1280 = vmatprep.subr.mxu0 0.0
    %1281 = vmatpush1.msra.mxu0 %v1245
    %1282 = vmatprep.subr.mxu0 0.0
    %1283 = vmatpush1.msra.mxu0 %v1243
    %1284 = vmatprep.subr.mxu0 0.0
    %1285 = vmatpush1.msra.mxu0 %v1241
    %1286 = vmatprep.subr.mxu0 0.0
    %1287 = vmatpush1.msra.mxu0 %v1239
    %1288 = vmatprep.subr.mxu0 0.0
    %1289 = vmatpush1.msra.mxu0 %v1237
    %1290 = vmatprep.subr.mxu0 0.0
    %1291 = vmatpush1.msra.mxu0 %v1235
    %1292 = vmatprep.subr.mxu0 0.0
    %1293 = vmatpush1.msra.mxu0 %v1233
    %1294 = vmatprep.subr.mxu0 0.0
    %1295 = vmatpush2.msra.mxu0 0.0
    %1296 = vmatprep.subr.mxu0 0.0
    %1297 = vmatpush2.msra.mxu0 0.0
    %1298 = vmatprep.subr.mxu0 0.0
    %1299 = vmatpush2.msra.mxu0 0.0
    %1300 = vmatprep.subr.mxu0 0.0
    %1301 = vmatpush2.msra.mxu0 0.0
    %1302 = vmatprep.subr.mxu0 0.0
    %1303 = vmatpush2.msra.mxu0 0.0
    %1304 = vmatprep.subr.mxu0 0.0
    %1305 = vmatpush2.msra.mxu0 0.0
    %1306 = vmatprep.subr.mxu0 0.0
    %1307 = vmatpush2.msra.mxu0 0.0
    %1308 = vmatprep.subr.mxu0 0.0
    %1309 = vmatpush2.msra.mxu0 0.0
    %1310 = vmatprep.subr.mxu0 0.0
    %1311 = vmatpush2.msra.mxu0 0.0
    %1312 = vmatprep.subr.mxu0 0.0
    %1313 = vmatpush2.msra.mxu0 0.0
    %1314 = vmatprep.subr.mxu0 0.0
    %1315 = vmatpush2.msra.mxu0 0.0
    %1316 = vmatprep.subr.mxu0 0.0
    %1317 = vmatpush2.msra.mxu0 0.0
    %1318 = vmatprep.subr.mxu0 0.0
    %1319 = vmatpush2.msra.mxu0 0.0
    %1320 = vmatprep.subr.mxu0 0.0
    %1321 = vmatpush2.msra.mxu0 0.0
    %1322 = vmatprep.subr.mxu0 0.0
    %1323 = vmatpush2.msra.mxu0 0.0
    %1324 = vmatprep.subr.mxu0 0.0
    %1325 = vmatpush2.msra.mxu0 0.0
    %1326 = vmatprep.mubr.f32.mxu0 0.0
    %1327 = vmatmul.mubr.f32.gmra.mxu0 %v1257
    %v1328 = vpop.f32.mrf.mxu0
    %v1329 = vadd.f32 0.0, %v1328
    %v1330 = vpop.f32.mrf.mxu0
    %1331 = vmatprep.mubr.f32.mxu0 0.0
    %1332 = vmatmul.mubr.f32.gmra.mxu0 %v1260
    %v1333 = vpop.f32.mrf.mxu0
    %v1334 = vadd.f32 0.0, %v1333
    %v1335 = vpop.f32.mrf.mxu0
    %1336 = vdwg.mxu0
    %v1337 = vmul.f32 %v1329, %v1329
    %v1338 = vmul.f32 %v1334, %v1334
    %v1339 = vsel %vm186, %v1337, 0.0
    %1340 = vadd.xlane.f32.xlu0 %v1339
    %v1341 = vpop.xlane.xlu0 %1340
    %v1342 = vsel %vm186, %v1338, 0.0
    %1343 = vadd.xlane.f32.xlu0 %v1342
    %v1344 = vpop.xlane.xlu0 %1343
    %v1345 = vmul.f32 %v1341, %v193
    %v1346 = vmul.f32 %v1344, %v193
    %v1347 = vadd.f32 %v1345, 1e-06
    %v1348 = vadd.f32 %v1346, 1e-06
    %v1349 = vrsqrt.pop %v1347
    %v1350 = vrsqrt.pop %v1348
    %v1351 = vmul.f32 %v1329, %v1349
    %v1352 = vmul.f32 %v1334, %v1350
    %1355 = vrot.lane.b32.xlu0 %v1020, 32
    %v1356 = vpop.permute.xlu0 %1355
    %1357 = vrot.lane.b32.xlu0 %v1025, 32
    %v1358 = vpop.permute.xlu0 %1357
    %v1361 = vmul.f32 %v1351, %v1356
    %v1362 = vmul.f32 %v1352, %v1358
    %s1363 = scalar_lea.vmem %s3, 32
    %v1364 = vld [vmem:[%s1363] sm:$0xff]
    %v1365 = vld [vmem:[%s1363 + $0x8] sm:$0xff]
    %v1366 = vld [vmem:[%s1363 + $0x10] sm:$0xff]
    %v1367 = vld [vmem:[%s1363 + $0x18] sm:$0xff]
    %v1369 = vsel %vm186, %v1361, 0
    %v1372 = vsel %vm186, %v1362, 0
    %1374 = vmatprep.subr.mxu0 0.0
    %1375 = vmatpush1.msra.mxu0 0.0
    %1376 = vmatprep.subr.mxu0 0.0
    %1377 = vmatpush1.msra.mxu0 0.0
    %1378 = vmatprep.subr.mxu0 0.0
    %1379 = vmatpush1.msra.mxu0 0.0
    %1380 = vmatprep.subr.mxu0 0.0
    %1381 = vmatpush1.msra.mxu0 0.0
    %1382 = vmatprep.subr.mxu0 0.0
    %1383 = vmatpush1.msra.mxu0 0.0
    %1384 = vmatprep.subr.mxu0 0.0
    %1385 = vmatpush1.msra.mxu0 0.0
    %1386 = vmatprep.subr.mxu0 0.0
    %1387 = vmatpush1.msra.mxu0 0.0
    %1388 = vmatprep.subr.mxu0 0.0
    %1389 = vmatpush1.msra.mxu0 0.0
    %1390 = vmatprep.subr.mxu0 0.0
    %1391 = vmatpush1.msra.mxu0 0.0
    %1392 = vmatprep.subr.mxu0 0.0
    %1393 = vmatpush1.msra.mxu0 0.0
    %1394 = vmatprep.subr.mxu0 0.0
    %1395 = vmatpush1.msra.mxu0 0.0
    %1396 = vmatprep.subr.mxu0 0.0
    %1397 = vmatpush1.msra.mxu0 0.0
    %1398 = vmatprep.subr.mxu0 0.0
    %1399 = vmatpush1.msra.mxu0 %v1367
    %1400 = vmatprep.subr.mxu0 0.0
    %1401 = vmatpush1.msra.mxu0 %v1366
    %1402 = vmatprep.subr.mxu0 0.0
    %1403 = vmatpush1.msra.mxu0 %v1365
    %1404 = vmatprep.subr.mxu0 0.0
    %1405 = vmatpush1.msra.mxu0 %v1364
    %1406 = vmatprep.subr.mxu0 0.0
    %1407 = vmatpush2.msra.mxu0 0.0
    %1408 = vmatprep.subr.mxu0 0.0
    %1409 = vmatpush2.msra.mxu0 0.0
    %1410 = vmatprep.subr.mxu0 0.0
    %1411 = vmatpush2.msra.mxu0 0.0
    %1412 = vmatprep.subr.mxu0 0.0
    %1413 = vmatpush2.msra.mxu0 0.0
    %1414 = vmatprep.subr.mxu0 0.0
    %1415 = vmatpush2.msra.mxu0 0.0
    %1416 = vmatprep.subr.mxu0 0.0
    %1417 = vmatpush2.msra.mxu0 0.0
    %1418 = vmatprep.subr.mxu0 0.0
    %1419 = vmatpush2.msra.mxu0 0.0
    %1420 = vmatprep.subr.mxu0 0.0
    %1421 = vmatpush2.msra.mxu0 0.0
    %1422 = vmatprep.subr.mxu0 0.0
    %1423 = vmatpush2.msra.mxu0 0.0
    %1424 = vmatprep.subr.mxu0 0.0
    %1425 = vmatpush2.msra.mxu0 0.0
    %1426 = vmatprep.subr.mxu0 0.0
    %1427 = vmatpush2.msra.mxu0 0.0
    %1428 = vmatprep.subr.mxu0 0.0
    %1429 = vmatpush2.msra.mxu0 0.0
    %1430 = vmatprep.subr.mxu0 0.0
    %1431 = vmatpush2.msra.mxu0 0.0
    %1432 = vmatprep.subr.mxu0 0.0
    %1433 = vmatpush2.msra.mxu0 0.0
    %1434 = vmatprep.subr.mxu0 0.0
    %1435 = vmatpush2.msra.mxu0 0.0
    %1436 = vmatprep.subr.mxu0 0.0
    %1437 = vmatpush2.msra.mxu0 0.0
    %1438 = vmatprep.mubr.f32.mxu0 0.0
    %1439 = vmatmul.mubr.f32.gmra.mxu0 %v1369
    %v1440 = vpop.f32.mrf.mxu0
    %v1441 = vadd.f32 0.0, %v1440
    %v1442 = vpop.f32.mrf.mxu0
    %1443 = vmatprep.mubr.f32.mxu0 0.0
    %1444 = vmatmul.mubr.f32.gmra.mxu0 %v1372
    %v1445 = vpop.f32.mrf.mxu0
    %v1446 = vadd.f32 0.0, %v1445
    %v1447 = vpop.f32.mrf.mxu0
    %1448 = vdwg.mxu0
    %v1449 = vadd.f32 %v924, %v1441
    %v1450 = vadd.f32 %v925, %v1446
    %v1451 = vmul.f32 %v1449, %v1449
    %v1452 = vmul.f32 %v1450, %v1450
    %v1453 = vsel %vm186, %v1451, 0.0
    %1454 = vadd.xlane.f32.xlu0 %v1453
    %v1455 = vpop.xlane.xlu0 %1454
    %v1456 = vsel %vm186, %v1452, 0.0
    %1457 = vadd.xlane.f32.xlu0 %v1456
    %v1458 = vpop.xlane.xlu0 %1457
    %v1459 = vmul.f32 %v1455, %v193
    %v1460 = vmul.f32 %v1458, %v193
    %v1461 = vadd.f32 %v1459, 1e-06
    %v1462 = vadd.f32 %v1460, 1e-06
    %v1463 = vrsqrt.pop %v1461
    %v1464 = vrsqrt.pop %v1462
    %v1465 = vmul.f32 %v1449, %v1463
    %v1466 = vmul.f32 %v1450, %v1464
    %s1467 = scalar_lea.vmem %s4, 32
    %v1468 = vld [vmem:[%s1467] sm:$0xff]
    %v1469 = vld [vmem:[%s1467 + $0x8] sm:$0xff]
    %v1470 = vld [vmem:[%s1467 + $0x10] sm:$0xff]
    %v1471 = vld [vmem:[%s1467 + $0x18] sm:$0xff]
    %v1473 = vsel %vm186, %v1465, 0
    %v1476 = vsel %vm186, %v1466, 0
    %1478 = vmatprep.subr.mxu0 0.0
    %1479 = vmatpush1.msra.mxu0 0.0
    %1480 = vmatprep.subr.mxu0 0.0
    %1481 = vmatpush1.msra.mxu0 0.0
    %1482 = vmatprep.subr.mxu0 0.0
    %1483 = vmatpush1.msra.mxu0 0.0
    %1484 = vmatprep.subr.mxu0 0.0
    %1485 = vmatpush1.msra.mxu0 0.0
    %1486 = vmatprep.subr.mxu0 0.0
    %1487 = vmatpush1.msra.mxu0 0.0
    %1488 = vmatprep.subr.mxu0 0.0
    %1489 = vmatpush1.msra.mxu0 0.0
    %1490 = vmatprep.subr.mxu0 0.0
    %1491 = vmatpush1.msra.mxu0 0.0
    %1492 = vmatprep.subr.mxu0 0.0
    %1493 = vmatpush1.msra.mxu0 0.0
    %1494 = vmatprep.subr.mxu0 0.0
    %1495 = vmatpush1.msra.mxu0 0.0
    %1496 = vmatprep.subr.mxu0 0.0
    %1497 = vmatpush1.msra.mxu0 0.0
    %1498 = vmatprep.subr.mxu0 0.0
    %1499 = vmatpush1.msra.mxu0 0.0
    %1500 = vmatprep.subr.mxu0 0.0
    %1501 = vmatpush1.msra.mxu0 0.0
    %1502 = vmatprep.subr.mxu0 0.0
    %1503 = vmatpush1.msra.mxu0 %v1471
    %1504 = vmatprep.subr.mxu0 0.0
    %1505 = vmatpush1.msra.mxu0 %v1470
    %1506 = vmatprep.subr.mxu0 0.0
    %1507 = vmatpush1.msra.mxu0 %v1469
    %1508 = vmatprep.subr.mxu0 0.0
    %1509 = vmatpush1.msra.mxu0 %v1468
    %1510 = vmatprep.subr.mxu0 0.0
    %1511 = vmatpush2.msra.mxu0 0.0
    %1512 = vmatprep.subr.mxu0 0.0
    %1513 = vmatpush2.msra.mxu0 0.0
    %1514 = vmatprep.subr.mxu0 0.0
    %1515 = vmatpush2.msra.mxu0 0.0
    %1516 = vmatprep.subr.mxu0 0.0
    %1517 = vmatpush2.msra.mxu0 0.0
    %1518 = vmatprep.subr.mxu0 0.0
    %1519 = vmatpush2.msra.mxu0 0.0
    %1520 = vmatprep.subr.mxu0 0.0
    %1521 = vmatpush2.msra.mxu0 0.0
    %1522 = vmatprep.subr.mxu0 0.0
    %1523 = vmatpush2.msra.mxu0 0.0
    %1524 = vmatprep.subr.mxu0 0.0
    %1525 = vmatpush2.msra.mxu0 0.0
    %1526 = vmatprep.subr.mxu0 0.0
    %1527 = vmatpush2.msra.mxu0 0.0
    %1528 = vmatprep.subr.mxu0 0.0
    %1529 = vmatpush2.msra.mxu0 0.0
    %1530 = vmatprep.subr.mxu0 0.0
    %1531 = vmatpush2.msra.mxu0 0.0
    %1532 = vmatprep.subr.mxu0 0.0
    %1533 = vmatpush2.msra.mxu0 0.0
    %1534 = vmatprep.subr.mxu0 0.0
    %1535 = vmatpush2.msra.mxu0 0.0
    %1536 = vmatprep.subr.mxu0 0.0
    %1537 = vmatpush2.msra.mxu0 0.0
    %1538 = vmatprep.subr.mxu0 0.0
    %1539 = vmatpush2.msra.mxu0 0.0
    %1540 = vmatprep.subr.mxu0 0.0
    %1541 = vmatpush2.msra.mxu0 0.0
    %1542 = vmatprep.mubr.f32.mxu0 0.0
    %1543 = vmatmul.mubr.f32.gmra.mxu0 %v1473
    %v1544 = vpop.f32.mrf.mxu0
    %v1545 = vadd.f32 0.0, %v1544
    %v1546 = vpop.f32.mrf.mxu0
    %1547 = vmatprep.mubr.f32.mxu0 0.0
    %1548 = vmatmul.mubr.f32.gmra.mxu0 %v1476
    %v1549 = vpop.f32.mrf.mxu0
    %v1550 = vadd.f32 0.0, %v1549
    %v1551 = vpop.f32.mrf.mxu0
    %1552 = vdwg.mxu0
    %1555 = vrot.lane.b32.xlu0 %v1545, 64
    %v1556 = vpop.permute.xlu0 %1555
    %1557 = vrot.lane.b32.xlu0 %v1550, 64
    %v1558 = vpop.permute.xlu0 %1557
    %v1561 = vmul.f32 %v1545, %v1556
    %v1562 = vmul.f32 %v1550, %v1558
    %s1563 = scalar_lea.vmem %s5, 64
    %v1564 = vld [vmem:[%s1563] sm:$0xff]
    %v1565 = vld [vmem:[%s1563 + $0x8] sm:$0xff]
    %v1566 = vld [vmem:[%s1563 + $0x10] sm:$0xff]
    %v1567 = vld [vmem:[%s1563 + $0x18] sm:$0xff]
    %v1568 = vld [vmem:[%s1563 + $0x20] sm:$0xff]
    %v1569 = vld [vmem:[%s1563 + $0x28] sm:$0xff]
    %v1570 = vld [vmem:[%s1563 + $0x30] sm:$0xff]
    %v1571 = vld [vmem:[%s1563 + $0x38] sm:$0xff]
    %v1573 = vsel %vm94, %v1561, 0
    %v1576 = vsel %vm94, %v1562, 0
    %1578 = vmatprep.subr.mxu0 0.0
    %1579 = vmatpush1.msra.mxu0 0.0
    %1580 = vmatprep.subr.mxu0 0.0
    %1581 = vmatpush1.msra.mxu0 0.0
    %1582 = vmatprep.subr.mxu0 0.0
    %1583 = vmatpush1.msra.mxu0 0.0
    %1584 = vmatprep.subr.mxu0 0.0
    %1585 = vmatpush1.msra.mxu0 0.0
    %1586 = vmatprep.subr.mxu0 0.0
    %1587 = vmatpush1.msra.mxu0 0.0
    %1588 = vmatprep.subr.mxu0 0.0
    %1589 = vmatpush1.msra.mxu0 0.0
    %1590 = vmatprep.subr.mxu0 0.0
    %1591 = vmatpush1.msra.mxu0 0.0
    %1592 = vmatprep.subr.mxu0 0.0
    %1593 = vmatpush1.msra.mxu0 0.0
    %1594 = vmatprep.subr.mxu0 0.0
    %1595 = vmatpush1.msra.mxu0 %v1571
    %1596 = vmatprep.subr.mxu0 0.0
    %1597 = vmatpush1.msra.mxu0 %v1570
    %1598 = vmatprep.subr.mxu0 0.0
    %1599 = vmatpush1.msra.mxu0 %v1569
    %1600 = vmatprep.subr.mxu0 0.0
    %1601 = vmatpush1.msra.mxu0 %v1568
    %1602 = vmatprep.subr.mxu0 0.0
    %1603 = vmatpush1.msra.mxu0 %v1567
    %1604 = vmatprep.subr.mxu0 0.0
    %1605 = vmatpush1.msra.mxu0 %v1566
    %1606 = vmatprep.subr.mxu0 0.0
    %1607 = vmatpush1.msra.mxu0 %v1565
    %1608 = vmatprep.subr.mxu0 0.0
    %1609 = vmatpush1.msra.mxu0 %v1564
    %1610 = vmatprep.subr.mxu0 0.0
    %1611 = vmatpush2.msra.mxu0 0.0
    %1612 = vmatprep.subr.mxu0 0.0
    %1613 = vmatpush2.msra.mxu0 0.0
    %1614 = vmatprep.subr.mxu0 0.0
    %1615 = vmatpush2.msra.mxu0 0.0
    %1616 = vmatprep.subr.mxu0 0.0
    %1617 = vmatpush2.msra.mxu0 0.0
    %1618 = vmatprep.subr.mxu0 0.0
    %1619 = vmatpush2.msra.mxu0 0.0
    %1620 = vmatprep.subr.mxu0 0.0
    %1621 = vmatpush2.msra.mxu0 0.0
    %1622 = vmatprep.subr.mxu0 0.0
    %1623 = vmatpush2.msra.mxu0 0.0
    %1624 = vmatprep.subr.mxu0 0.0
    %1625 = vmatpush2.msra.mxu0 0.0
    %1626 = vmatprep.subr.mxu0 0.0
    %1627 = vmatpush2.msra.mxu0 0.0
    %1628 = vmatprep.subr.mxu0 0.0
    %1629 = vmatpush2.msra.mxu0 0.0
    %1630 = vmatprep.subr.mxu0 0.0
    %1631 = vmatpush2.msra.mxu0 0.0
    %1632 = vmatprep.subr.mxu0 0.0
    %1633 = vmatpush2.msra.mxu0 0.0
    %1634 = vmatprep.subr.mxu0 0.0
    %1635 = vmatpush2.msra.mxu0 0.0
    %1636 = vmatprep.subr.mxu0 0.0
    %1637 = vmatpush2.msra.mxu0 0.0
    %1638 = vmatprep.subr.mxu0 0.0
    %1639 = vmatpush2.msra.mxu0 0.0
    %1640 = vmatprep.subr.mxu0 0.0
    %1641 = vmatpush2.msra.mxu0 0.0
    %1642 = vmatprep.mubr.f32.mxu0 0.0
    %1643 = vmatmul.mubr.f32.gmra.mxu0 %v1573
    %v1644 = vpop.f32.mrf.mxu0
    %v1645 = vadd.f32 0.0, %v1644
    %v1646 = vpop.f32.mrf.mxu0
    %1647 = vmatprep.mubr.f32.mxu0 0.0
    %1648 = vmatmul.mubr.f32.gmra.mxu0 %v1576
    %v1649 = vpop.f32.mrf.mxu0
    %v1650 = vadd.f32 0.0, %v1649
    %v1651 = vpop.f32.mrf.mxu0
    %1652 = vdwg.mxu0
    %v1653 = vadd.f32 %v1449, %v1645
    %v1654 = vadd.f32 %v1450, %v1650
    %v1655 = vmul.f32 %v1653, %v1653
    %v1656 = vmul.f32 %v1654, %v1654
    %v1657 = vsel %vm186, %v1655, 0.0
    %1658 = vadd.xlane.f32.xlu0 %v1657
    %v1659 = vpop.xlane.xlu0 %1658
    %v1660 = vsel %vm186, %v1656, 0.0
    %1661 = vadd.xlane.f32.xlu0 %v1660
    %v1662 = vpop.xlane.xlu0 %1661
    %v1663 = vmul.f32 %v1659, %v193
    %v1664 = vmul.f32 %v1662, %v193
    %v1665 = vadd.f32 %v1663, 1e-06
    %v1666 = vadd.f32 %v1664, 1e-06
    %v1667 = vrsqrt.pop %v1665
    %v1668 = vrsqrt.pop %v1666
    %v1669 = vmul.f32 %v1653, %v1667
    %v1670 = vmul.f32 %v1654, %v1668
    %v1672 = vrot.slane %v1669, 7
    %v1675 = vrot.slane %v1670, 6
    %vm1677 = vcmask 1040384
    %v1678 = vsel %vm1677, %v1672, %v1675
    %v1679 = vld [vmem:[%s11] sm:$0xff]
    %v1680 = vld [vmem:[%s11 + $0x8] sm:$0xff]
    %v1681 = vld [vmem:[%s11 + $0x10] sm:$0xff]
    %v1682 = vld [vmem:[%s11 + $0x18] sm:$0xff]
    %v1684 = vsel %vm186, %v1678, 0
    %1686 = vmatprep.subr.mxu0 0.0
    %1687 = vmatpush1.msra.mxu0 0.0
    %1688 = vmatprep.subr.mxu0 0.0
    %1689 = vmatpush1.msra.mxu0 0.0
    %1690 = vmatprep.subr.mxu0 0.0
    %1691 = vmatpush1.msra.mxu0 0.0
    %1692 = vmatprep.subr.mxu0 0.0
    %1693 = vmatpush1.msra.mxu0 0.0
    %1694 = vmatprep.subr.mxu0 0.0
    %1695 = vmatpush1.msra.mxu0 0.0
    %1696 = vmatprep.subr.mxu0 0.0
    %1697 = vmatpush1.msra.mxu0 0.0
    %1698 = vmatprep.subr.mxu0 0.0
    %1699 = vmatpush1.msra.mxu0 0.0
    %1700 = vmatprep.subr.mxu0 0.0
    %1701 = vmatpush1.msra.mxu0 0.0
    %1702 = vmatprep.subr.mxu0 0.0
    %1703 = vmatpush1.msra.mxu0 0.0
    %1704 = vmatprep.subr.mxu0 0.0
    %1705 = vmatpush1.msra.mxu0 0.0
    %1706 = vmatprep.subr.mxu0 0.0
    %1707 = vmatpush1.msra.mxu0 0.0
    %1708 = vmatprep.subr.mxu0 0.0
    %1709 = vmatpush1.msra.mxu0 0.0
    %1710 = vmatprep.subr.mxu0 0.0
    %1711 = vmatpush1.msra.mxu0 %v1682
    %1712 = vmatprep.subr.mxu0 0.0
    %1713 = vmatpush1.msra.mxu0 %v1681
    %1714 = vmatprep.subr.mxu0 0.0
    %1715 = vmatpush1.msra.mxu0 %v1680
    %1716 = vmatprep.subr.mxu0 0.0
    %1717 = vmatpush1.msra.mxu0 %v1679
    %1718 = vmatprep.subr.mxu0 0.0
    %1719 = vmatpush2.msra.mxu0 0.0
    %1720 = vmatprep.subr.mxu0 0.0
    %1721 = vmatpush2.msra.mxu0 0.0
    %1722 = vmatprep.subr.mxu0 0.0
    %1723 = vmatpush2.msra.mxu0 0.0
    %1724 = vmatprep.subr.mxu0 0.0
    %1725 = vmatpush2.msra.mxu0 0.0
    %1726 = vmatprep.subr.mxu0 0.0
    %1727 = vmatpush2.msra.mxu0 0.0
    %1728 = vmatprep.subr.mxu0 0.0
    %1729 = vmatpush2.msra.mxu0 0.0
    %1730 = vmatprep.subr.mxu0 0.0
    %1731 = vmatpush2.msra.mxu0 0.0
    %1732 = vmatprep.subr.mxu0 0.0
    %1733 = vmatpush2.msra.mxu0 0.0
    %1734 = vmatprep.subr.mxu0 0.0
    %1735 = vmatpush2.msra.mxu0 0.0
    %1736 = vmatprep.subr.mxu0 0.0
    %1737 = vmatpush2.msra.mxu0 0.0
    %1738 = vmatprep.subr.mxu0 0.0
    %1739 = vmatpush2.msra.mxu0 0.0
    %1740 = vmatprep.subr.mxu0 0.0
    %1741 = vmatpush2.msra.mxu0 0.0
    %1742 = vmatprep.subr.mxu0 0.0
    %1743 = vmatpush2.msra.mxu0 0.0
    %1744 = vmatprep.subr.mxu0 0.0
    %1745 = vmatpush2.msra.mxu0 0.0
    %1746 = vmatprep.subr.mxu0 0.0
    %1747 = vmatpush2.msra.mxu0 0.0
    %1748 = vmatprep.subr.mxu0 0.0
    %1749 = vmatpush2.msra.mxu0 0.0
    %1750 = vmatprep.mubr.f32.mxu0 0.0
    %1751 = vmatmul.mubr.f32.gmra.mxu0 %v1684
    %v1752 = vpop.f32.mrf.mxu0
    %v1753 = vadd.f32 0.0, %v1752
    %v1754 = vpop.f32.mrf.mxu0
    %1755 = vdwg.mxu0
    %1756 = vst [vmem:[#allocation7] sm:$0x3] %v1753
    // Predicated region
    $region58: #{tpu_custom_call.1} parent=1 // pred_check
      _
    $region59: #{tpu_custom_call.1} parent=1 // pred_check_branch
      %1758 = sbr.rel (0) target = $region61
    $region60: #{tpu_custom_call.1} parent=1 // pred_region
      %s1760 = ssub.s32 32, 32
      %1761 = vsyncadd [#allocation4], %s1760
      %s1763 = sshll.u32 [#allocation7], 4
      %s1764 = int_to_ptr.vmem [resolvable:$true] %s1763
      %1766 = dma.vmem_to_hbm [thread:$0]  %s1764, 32, %s12, [#allocation4]
    $region61: #{tpu_custom_call.1} parent=1 // pred_fallthru
      _
    // Predicated region
    $region62: #{tpu_custom_call.1} parent=1 // pred_check
      _
    $region63: #{tpu_custom_call.1} parent=1 // pred_check_branch
      %1768 = sbr.rel (0) target = $region65
    $region64: #{tpu_custom_call.1} parent=1 // pred_region
      %1769 = dma.done [#allocation4], 32
    $region65: #{tpu_custom_call.1} parent=1 // pred_fallthru
      _
    %1770 = vsyncpa [#allocation3], 1
    %1771 = vsyncpa [#allocation6], 1
    %1772 = vsyncpa [#allocation4], 1

</llo_original>
